<compile_context>
chip_gen: v6e
topology: v6e:2x2x1
jax: 0.10.0
libtpu: 0.0.40
codegen_flags: <defaults>
</compile_context>

<pallas_src>
import functools

import jax
import jax.numpy as jnp
from jax.experimental import pallas as pl
from jax.experimental.pallas import tpu as pltpu


@functools.lru_cache(maxsize=None)
def _vmem_limit_bytes():
    """Generation-aware VMEM budget: ~48 MiB on v7x (64 MiB phys), ~96 MiB on v5e/v6e."""
    try:
        cap = int(pltpu.get_tpu_info().vmem_capacity_bytes)
    except Exception:
        cap = 64 * 1024 * 1024
    return min(cap * 3 // 4, 100 * 1024 * 1024)


# ---------------------------------------------------------------------------
# Kernel A: support = x @ W  (computed once per layer input, bf16 output)
# ---------------------------------------------------------------------------
def _feature_transform_kernel(x_ref, w_ref, o_ref):
    # MXU accumulates in f32; one small VPU cast to bf16 on the way out.
    o_ref[...] = jnp.dot(x_ref[...], w_ref[...],
                         preferred_element_type=jnp.float32).astype(o_ref.dtype)


def feature_transform(x, w, *, tile_rows=512):
    """support = x @ w in bf16 (f32 MXU accumulation). One launch, row-tiled."""
    N, F = x.shape
    F2, H = w.shape
    assert F == F2
    tr = min(tile_rows, N)
    assert N % tr == 0 and tr % 8 == 0
    # TODO(synk): K-tile the contraction if the feature dim F is ever too large
    # for a (tr, F) block + (F, H) resident weight to fit VMEM.
    return pl.pallas_call(
        _feature_transform_kernel,
        out_shape=jax.ShapeDtypeStruct((N, H), jnp.bfloat16),
        grid_spec=pltpu.PrefetchScalarGridSpec(
            num_scalar_prefetch=0,
            grid=(N // tr,),
            in_specs=[
                pl.BlockSpec((tr, F), lambda i: (i, 0)),
                pl.BlockSpec((F, H), lambda i: (0, 0)),   # W resident
            ],
            out_specs=pl.BlockSpec((tr, H), lambda i: (i, 0)),
        ),
        compiler_params=pltpu.CompilerParams(
            dimension_semantics=("parallel",),
            vmem_limit_bytes=_vmem_limit_bytes()),
    )(x.astype(jnp.bfloat16), w.astype(jnp.bfloat16))


# ---------------------------------------------------------------------------
# Kernel B: block-sparse adjacency aggregation
#   out = act(g @ support + b) [optionally followed by @ W_out in the epilogue]
# ---------------------------------------------------------------------------
def _gcn_aggregate_kernel(counts_ref, cols_ref, g_ref, s_ref, *rest,
                          nk, relu, fuse_w_out):
    if fuse_w_out:
        w_out_ref, b_ref, o_ref, acc_ref = rest          # f32 scratch (bf16 output)
    else:
        b_ref, o_ref = rest
        acc_ref = o_ref                                   # accumulate into f32 output

    i = pl.program_id(0)
    k = pl.program_id(1)

    @pl.when(k == 0)
    def _init():
        acc_ref[...] = jnp.zeros_like(acc_ref)

    # Skip MXU work for grid slots beyond this row block's nonzero column blocks.
    # (Their index_map repeats the previous block index, so the DMA is skipped too.)
    @pl.when(k < counts_ref[i])
    def _accumulate():
        acc_ref[...] += jnp.dot(g_ref[...], s_ref[...],
                                preferred_element_type=jnp.float32)

    @pl.when(k == nk - 1)
    def _epilogue():
        r = acc_ref[...] + b_ref[...]            # (1, H) broadcasts over (tm, H)
        if relu:
            r = jnp.maximum(r, 0.0)
        if fuse_w_out:
            # Fused next-layer feature transform: the (tm, H) tile is already
            # on-chip, so this extra MXU dot is nearly free.
            r = jnp.dot(r.astype(jnp.bfloat16), w_out_ref[...],
                        preferred_element_type=jnp.float32)
        o_ref[...] = r.astype(o_ref.dtype)


def gcn_aggregate(g_bf, support_bf, bias, counts, col_ids, *, w_out=None,
                  relu=False, out_dtype=jnp.float32, tm, tk):
    """act(g @ support + b) (optionally @ w_out) with zero-block skipping."""
    M, K = g_bf.shape
    K2, H = support_bf.shape
    assert K == K2 and bias.shape == (H,)
    assert M % tm == 0 and K % tk == 0
    n_i, nk = M // tm, K // tk

    b2d = bias.reshape(1, H).astype(jnp.float32)
    fuse = w_out is not None

    kernel = functools.partial(_gcn_aggregate_kernel, nk=nk, relu=relu,
                               fuse_w_out=fuse)

    in_specs = [
        # g block: column-block index comes from the prefetched nonzero list.
        pl.BlockSpec((tm, tk), lambda i, k, counts, cols: (i, cols[i, k])),
        # matching support block (for small graphs this could be made fully
        # VMEM-resident instead; at pokec scale it must stay blocked).
        pl.BlockSpec((tk, H), lambda i, k, counts, cols: (cols[i, k], 0)),
    ]
    operands = [g_bf, support_bf]
    if fuse:
        in_specs.append(pl.BlockSpec((H, H), lambda i, k, counts, cols: (0, 0)))
        operands.append(w_out.astype(jnp.bfloat16))
    in_specs.append(pl.BlockSpec((1, H), lambda i, k, counts, cols: (0, 0)))
    operands.append(b2d)

    # f32 scratch accumulator only when the output itself is not f32.
    scratch = [pltpu.VMEM((tm, H), jnp.float32)] if fuse else []

    return pl.pallas_call(
        kernel,
        out_shape=jax.ShapeDtypeStruct((M, H), out_dtype),
        grid_spec=pltpu.PrefetchScalarGridSpec(
            num_scalar_prefetch=2,
            grid=(n_i, nk),
            in_specs=in_specs,
            out_specs=pl.BlockSpec((tm, H), lambda i, k, counts, cols: (i, 0)),
            scratch_shapes=scratch,
        ),
        compiler_params=pltpu.CompilerParams(
            dimension_semantics=("parallel", "arbitrary"),
            vmem_limit_bytes=_vmem_limit_bytes()),
    )(counts, col_ids, *operands)


def _block_structure(g, tm, tk):
    """Per row block: count of nonzero column blocks + their indices (padded)."""
    M, K = g.shape
    n_i, n_k = M // tm, K // tk
    nnz = (g.reshape(n_i, tm, n_k, tk) != 0).any(axis=(1, 3))        # (n_i, n_k)
    counts = nnz.sum(axis=1).astype(jnp.int32)                       # (n_i,)
    # Nonzero column-block ids first, all-zero blocks after.
    order = jnp.argsort(jnp.logical_not(nnz).astype(jnp.int32), axis=1)
    order = order.astype(jnp.int32)
    # Pad tail slots with the last valid id so consecutive grid steps reuse the
    # already-resident block (Pallas skips the DMA when the index is unchanged).
    last_valid = jnp.take_along_axis(
        order, jnp.maximum(counts - 1, 0)[:, None], axis=1)
    kk = jnp.arange(n_k, dtype=jnp.int32)[None, :]
    col_ids = jnp.where(kk < counts[:, None], order, last_valid)
    return counts, col_ids


# ---------------------------------------------------------------------------
# Forward pass
# ---------------------------------------------------------------------------
@functools.partial(jax.jit, static_argnames=("tm", "tk"))
def gcn_forward(g, x, params, *, tm=512, tk=1024):
    """GCNForBiCls.forward(g, x) = gc2(dropout(relu(gc1(x, g))), g)."""
    M, K = g.shape
    assert M == K, "adjacency must be square"
    tm = min(tm, M)
    tk = min(tk, K)
    # v7x has two TensorCores: keep >= 2 row blocks on the "parallel" axis.
    if M // tm < 2 and tm % 2 == 0 and tm >= 16:
        tm //= 2
    assert M % tm == 0 and K % tk == 0, "node count must divide the tiles"
    assert tm % 8 == 0 and tk % 128 == 0
    # TODO(synk): pad/mask ragged node counts instead of asserting divisibility.

    w1, b1, w2, b2 = params["w1"], params["b1"], params["w2"], params["b2"]

    # Cast the adjacency to bf16 ONCE; both layers share it (under jit the cast
    # is a single fused pass, not one per layer).
    g_bf = g.astype(jnp.bfloat16)

    # Block-sparsity metadata, shared by both layers.
    # TODO(synk): for a static graph, compute this once outside the step and
    # pass it in — it depends only on the sparsity pattern, not the values.
    counts, col_ids = _block_structure(g_bf, tm, tk)

    # gc1 feature transform, computed exactly once.
    s1 = feature_transform(x, w1)                                   # (N, H) bf16

    # gc1 aggregation + relu, with gc2's feature transform fused into the
    # epilogue: s2 = relu(g @ s1 + b1) @ W2, emitted in bf16.
    s2 = gcn_aggregate(g_bf, s1, b1, counts, col_ids, w_out=w2, relu=True,
                       out_dtype=jnp.bfloat16, tm=tm, tk=tk)
    # TODO(synk): nn.Dropout(p=0.5) is identity in eval mode; train-mode
    # stochastic dropout (pltpu.prng_*) on h1 before the fused @W2 is not
    # reproduced here.

    # gc2 aggregation: out = g @ s2 + b2 (f32, accumulated in the output tile).
    out = gcn_aggregate(g_bf, s2, b2, counts, col_ids, w_out=None, relu=False,
                        out_dtype=jnp.float32, tm=tm, tk=tk)
    return out


def init_params(key, nfeat, nhid):
    """Deterministic uniform init matching GraphConvolution shapes."""
    k1, k2, k3, k4 = jax.random.split(key, 4)
    s1 = 1.0 / jnp.sqrt(jnp.float32(nhid))
    s2 = 1.0 / jnp.sqrt(jnp.float32(nhid))
    return {
        "w1": jax.random.uniform(k1, (nfeat, nhid), jnp.float32, -s1, s1),
        "b1": jax.random.uniform(k2, (nhid,), jnp.float32, -s1, s1),
        "w2": jax.random.uniform(k3, (nhid, nhid), jnp.float32, -s2, s2),
        "b2": jax.random.uniform(k4, (nhid,), jnp.float32, -s2, s2),
    }


if __name__ == "__main__":
    N, NFEAT, NHID = 512, 128, 128
    TM = TK = 128   # 4x4 adjacency blocks -> exercises nk>1 accumulation AND
                    # the block-sparse skip path (banded graph below).

    key = jax.random.PRNGKey(0)
    kg, kx, kp = jax.random.split(key, 3)

    # Banded random graph (edges only between nodes whose ids differ by <= 100),
    # symmetrized, self loops, then symmetric normalization.  Off-band 128x128
    # blocks are exactly zero, so the sparse-skip path is genuinely used.
    idx = jnp.arange(N)
    band = jnp.abs(idx[:, None] - idx[None, :]) <= 100
    a_raw = ((jax.random.uniform(kg, (N, N)) < 0.05) & band).astype(jnp.float32)
    a = jnp.maximum(a_raw, a_raw.T) + jnp.eye(N, dtype=jnp.float32)
    deg_inv_sqrt = 1.0 / jnp.sqrt(a.sum(axis=1))
    g = a * deg_inv_sqrt[:, None] * deg_inv_sqrt[None, :]

    x = jax.random.normal(kx, (N, NFEAT), dtype=jnp.float32)
    params = init_params(kp, NFEAT, NHID)

    out = jax.block_until_ready(gcn_forward(g, x, params, tm=TM, tk=TK))

    # Pure-JAX f32 reference; the kernel runs bf16 on the MXU with f32
    # accumulation, so the tolerance is loosened accordingly.
    h1_ref = jnp.maximum(g @ (x @ params["w1"]) + params["b1"], 0.0)
    ref = g @ (h1_ref @ params["w2"]) + params["b2"]
    assert out.shape == (N, NHID)
    assert jnp.allclose(out, ref, atol=2e-2, rtol=2e-2), \
        float(jnp.max(jnp.abs(out - ref)))

    # Sanity: the demo graph really has all-zero adjacency blocks, so the
    # sparse-skip path (pl.when + repeated block index) was exercised.
    nnz_blocks = (g.reshape(N // TM, TM, N // TK, TK) != 0).any(axis=(1, 3))
    assert not bool(nnz_blocks.all()), "demo graph unexpectedly dense"

    print("KERNEL_OK")
</pallas_src>

<mosaic_0001>
module attributes {stable_mosaic.version = 11 : i64} {
  func.func @_feature_transform_kernel(%arg0: i32, %arg1: memref<512x128xbf16, #tpu.memory_space<vmem>>, %arg2: memref<128x128xbf16, #tpu.memory_space<vmem>>, %arg3: memref<512x128xbf16, #tpu.memory_space<vmem>>) attributes {dimension_semantics = [#tpu.dimension_semantics<parallel>], iteration_bounds = array<i64: 1>, scalar_prefetch = 0 : i64, scratch_operands = 0 : i64, tpu.core_type = #tpu.core_type<tc>, window_params = [{transform_indices = @transform_0, window_bounds = array<i64: 512, 128>}, {pipeline_mode = #tpu.pipeline_mode<synchronous>, transform_indices = @transform_1, window_bounds = array<i64: 128, 128>}, {transform_indices = @transform_2, window_bounds = array<i64: 512, 128>}]} {
    %c0 = arith.constant 0 : index
    %c0_0 = arith.constant 0 : index
    %0 = vector.load %arg1[%c0, %c0_0] : memref<512x128xbf16, #tpu.memory_space<vmem>>, vector<512x128xbf16>
    %c0_1 = arith.constant 0 : index
    %c0_2 = arith.constant 0 : index
    %1 = vector.load %arg2[%c0_1, %c0_2] : memref<128x128xbf16, #tpu.memory_space<vmem>>, vector<128x128xbf16>
    %cst = arith.constant dense<0.000000e+00> : vector<512x128xf32>
    %2 = tpu.matmul %0, %1, %cst {dimension_numbers = #tpu.dot_dimension_numbers<[1], [0], [0], [1], [0, 0, 1, 1], [], []>} : vector<512x128xbf16>, vector<128x128xbf16>, vector<512x128xf32> -> vector<512x128xf32>
    %3 = arith.truncf %2 : vector<512x128xf32> to vector<512x128xbf16>
    %c0_3 = arith.constant 0 : index
    %c0_4 = arith.constant 0 : index
    %4 = vector.load %arg3[%c0_3, %c0_4] : memref<512x128xbf16, #tpu.memory_space<vmem>>, vector<512x128xbf16>
    tpu.vector_store %arg3[%c0_3, %c0_4], %3 {strides = array<i32>} : memref<512x128xbf16, #tpu.memory_space<vmem>>, vector<512x128xbf16>,
    return
  }
  func.func @transform_0(%arg0: i32) -> (i32, i32) {
    %c0_i32 = arith.constant 0 : i32
    %c0_i32_0 = arith.constant 0 : i32
    return %arg0, %c0_i32 : i32, i32
  }
  func.func @transform_1(%arg0: i32) -> (i32, i32) {
    %c0_i32 = arith.constant 0 : i32
    %c0_i32_0 = arith.constant 0 : i32
    %c0_i32_1 = arith.constant 0 : i32
    return %c0_i32, %c0_i32_0 : i32, i32
  }
  func.func @transform_2(%arg0: i32) -> (i32, i32) {
    %c0_i32 = arith.constant 0 : i32
    %c0_i32_0 = arith.constant 0 : i32
    return %arg0, %c0_i32 : i32, i32
  }
}

module attributes {stable_mosaic.version = 11 : i64} {
  func.func @_gcn_aggregate_kernel(%arg0: i32, %arg1: i32, %arg2: memref<4xi32, #tpu.memory_space<smem>>, %arg3: memref<4x4xi32, #tpu.memory_space<smem>>, %arg4: memref<128x128xbf16, #tpu.memory_space<vmem>>, %arg5: memref<128x128xbf16, #tpu.memory_space<vmem>>, %arg6: memref<128x128xbf16, #tpu.memory_space<vmem>>, %arg7: memref<1x128xf32, #tpu.memory_space<vmem>>, %arg8: memref<128x128xbf16, #tpu.memory_space<vmem>>, %arg9: memref<128x128xf32, #tpu.memory_space<vmem>>) attributes {dimension_semantics = [#tpu.dimension_semantics<parallel>, #tpu.dimension_semantics<arbitrary>], iteration_bounds = array<i64: 4, 4>, scalar_prefetch = 2 : i64, scratch_operands = 1 : i64, tpu.core_type = #tpu.core_type<tc>, window_params = [{transform_indices = @transform_0, window_bounds = array<i64: 128, 128>}, {transform_indices = @transform_1, window_bounds = array<i64: 128, 128>}, {pipeline_mode = #tpu.pipeline_mode<synchronous>, transform_indices = @transform_2, window_bounds = array<i64: 128, 128>}, {pipeline_mode = #tpu.pipeline_mode<synchronous>, transform_indices = @transform_3, window_bounds = array<i64: 1, 128>}, {transform_indices = @transform_4, window_bounds = array<i64: 128, 128>}]} {
    %c0_i32 = arith.constant 0 : i32
    %0 = arith.cmpi eq, %arg1, %c0_i32 : i32
    %1 = arith.extui %0 : i1 to i32
    %c0_i32_0 = arith.constant 0 : i32
    %2 = arith.cmpi ne, %1, %c0_i32_0 : i32
    scf.if %2 {
      %cst = arith.constant 0.000000e+00 : f32
      %11 = vector.broadcast %cst : f32 to vector<128x128xf32>
      %c0 = arith.constant 0 : index
      %c0_3 = arith.constant 0 : index
      %12 = vector.load %arg9[%c0, %c0_3] : memref<128x128xf32, #tpu.memory_space<vmem>>, vector<128x128xf32>
      tpu.vector_store %arg9[%c0, %c0_3], %11 {strides = array<i32>} : memref<128x128xf32, #tpu.memory_space<vmem>>, vector<128x128xf32>,
    } else {
    }
    %3 = arith.index_cast %arg0 : i32 to index
    %4 = memref.load %arg2[%3] : memref<4xi32, #tpu.memory_space<smem>>
    %5 = arith.cmpi slt, %arg1, %4 : i32
    %6 = arith.extui %5 : i1 to i32
    %c0_i32_1 = arith.constant 0 : i32
    %7 = arith.cmpi ne, %6, %c0_i32_1 : i32
    scf.if %7 {
      %c0 = arith.constant 0 : index
      %c0_3 = arith.constant 0 : index
      %11 = vector.load %arg9[%c0, %c0_3] : memref<128x128xf32, #tpu.memory_space<vmem>>, vector<128x128xf32>
      %c0_4 = arith.constant 0 : index
      %c0_5 = arith.constant 0 : index
      %12 = vector.load %arg4[%c0_4, %c0_5] : memref<128x128xbf16, #tpu.memory_space<vmem>>, vector<128x128xbf16>
      %c0_6 = arith.constant 0 : index
      %c0_7 = arith.constant 0 : index
      %13 = vector.load %arg5[%c0_6, %c0_7] : memref<128x128xbf16, #tpu.memory_space<vmem>>, vector<128x128xbf16>
      %cst = arith.constant dense<0.000000e+00> : vector<128x128xf32>
      %14 = tpu.matmul %12, %13, %cst {dimension_numbers = #tpu.dot_dimension_numbers<[1], [0], [0], [1], [0, 0, 1, 1], [], []>} : vector<128x128xbf16>, vector<128x128xbf16>, vector<128x128xf32> -> vector<128x128xf32>
      %15 = arith.addf %11, %14 : vector<128x128xf32>
      %c0_8 = arith.constant 0 : index
      %c0_9 = arith.constant 0 : index
      %16 = vector.load %arg9[%c0_8, %c0_9] : memref<128x128xf32, #tpu.memory_space<vmem>>, vector<128x128xf32>
      tpu.vector_store %arg9[%c0_8, %c0_9], %15 {strides = array<i32>} : memref<128x128xf32, #tpu.memory_space<vmem>>, vector<128x128xf32>,
    } else {
    }
    %c3_i32 = arith.constant 3 : i32
    %8 = arith.cmpi eq, %arg1, %c3_i32 : i32
    %9 = arith.extui %8 : i1 to i32
    %c0_i32_2 = arith.constant 0 : i32
    %10 = arith.cmpi ne, %9, %c0_i32_2 : i32
    scf.if %10 {
      %c0 = arith.constant 0 : index
      %c0_3 = arith.constant 0 : index
      %11 = vector.load %arg9[%c0, %c0_3] : memref<128x128xf32, #tpu.memory_space<vmem>>, vector<128x128xf32>
      %c0_4 = arith.constant 0 : index
      %c0_5 = arith.constant 0 : index
      %12 = vector.load %arg7[%c0_4, %c0_5] : memref<1x128xf32, #tpu.memory_space<vmem>>, vector<1x128xf32>
      %13 = vector.broadcast %12 : vector<1x128xf32> to vector<128x128xf32>
      %14 = arith.addf %11, %13 : vector<128x128xf32>
      %cst = arith.constant 0.000000e+00 : f32
      %15 = vector.broadcast %cst : f32 to vector<128x128xf32>
      %16 = arith.maximumf %14, %15 : vector<128x128xf32>
      %17 = arith.truncf %16 : vector<128x128xf32> to vector<128x128xbf16>
      %c0_6 = arith.constant 0 : index
      %c0_7 = arith.constant 0 : index
      %18 = vector.load %arg6[%c0_6, %c0_7] : memref<128x128xbf16, #tpu.memory_space<vmem>>, vector<128x128xbf16>
      %cst_8 = arith.constant dense<0.000000e+00> : vector<128x128xf32>
      %19 = tpu.matmul %17, %18, %cst_8 {dimension_numbers = #tpu.dot_dimension_numbers<[1], [0], [0], [1], [0, 0, 1, 1], [], []>} : vector<128x128xbf16>, vector<128x128xbf16>, vector<128x128xf32> -> vector<128x128xf32>
      %20 = arith.truncf %19 : vector<128x128xf32> to vector<128x128xbf16>
      %c0_9 = arith.constant 0 : index
      %c0_10 = arith.constant 0 : index
      %21 = vector.load %arg8[%c0_9, %c0_10] : memref<128x128xbf16, #tpu.memory_space<vmem>>, vector<128x128xbf16>
      tpu.vector_store %arg8[%c0_9, %c0_10], %20 {strides = array<i32>} : memref<128x128xbf16, #tpu.memory_space<vmem>>, vector<128x128xbf16>,
    } else {
    }
    return
  }
  func.func @transform_0(%arg0: i32, %arg1: i32, %arg2: memref<4xi32, #tpu.memory_space<smem>>, %arg3: memref<4x4xi32, #tpu.memory_space<smem>>) -> (i32, i32) {
    %0 = arith.index_cast %arg0 : i32 to index
    %1 = arith.index_cast %arg1 : i32 to index
    %2 = memref.load %arg3[%0, %1] : memref<4x4xi32, #tpu.memory_space<smem>>
    %c0_i32 = arith.constant 0 : i32
    return %arg0, %2 : i32, i32
  }
  func.func @transform_1(%arg0: i32, %arg1: i32, %arg2: memref<4xi32, #tpu.memory_space<smem>>, %arg3: memref<4x4xi32, #tpu.memory_space<smem>>) -> (i32, i32) {
    %0 = arith.index_cast %arg0 : i32 to index
    %1 = arith.index_cast %arg1 : i32 to index
    %2 = memref.load %arg3[%0, %1] : memref<4x4xi32, #tpu.memory_space<smem>>
    %c0_i32 = arith.constant 0 : i32
    %c0_i32_0 = arith.constant 0 : i32
    return %2, %c0_i32 : i32, i32
  }
  func.func @transform_2(%arg0: i32, %arg1: i32, %arg2: memref<4xi32, #tpu.memory_space<smem>>, %arg3: memref<4x4xi32, #tpu.memory_space<smem>>) -> (i32, i32) {
    %c0_i32 = arith.constant 0 : i32
    %c0_i32_0 = arith.constant 0 : i32
    %c0_i32_1 = arith.constant 0 : i32
    return %c0_i32, %c0_i32_0 : i32, i32
  }
  func.func @transform_3(%arg0: i32, %arg1: i32, %arg2: memref<4xi32, #tpu.memory_space<smem>>, %arg3: memref<4x4xi32, #tpu.memory_space<smem>>) -> (i32, i32) {
    %c0_i32 = arith.constant 0 : i32
    %c0_i32_0 = arith.constant 0 : i32
    %c0_i32_1 = arith.constant 0 : i32
    return %c0_i32, %c0_i32_0 : i32, i32
  }
  func.func @transform_4(%arg0: i32, %arg1: i32, %arg2: memref<4xi32, #tpu.memory_space<smem>>, %arg3: memref<4x4xi32, #tpu.memory_space<smem>>) -> (i32, i32) {
    %c0_i32 = arith.constant 0 : i32
    %c0_i32_0 = arith.constant 0 : i32
    return %arg0, %c0_i32 : i32, i32
  }
}

module attributes {stable_mosaic.version = 11 : i64} {
  func.func @_gcn_aggregate_kernel(%arg0: i32, %arg1: i32, %arg2: memref<4xi32, #tpu.memory_space<smem>>, %arg3: memref<4x4xi32, #tpu.memory_space<smem>>, %arg4: memref<128x128xbf16, #tpu.memory_space<vmem>>, %arg5: memref<128x128xbf16, #tpu.memory_space<vmem>>, %arg6: memref<1x128xf32, #tpu.memory_space<vmem>>, %arg7: memref<128x128xf32, #tpu.memory_space<vmem>>) attributes {dimension_semantics = [#tpu.dimension_semantics<parallel>, #tpu.dimension_semantics<arbitrary>], iteration_bounds = array<i64: 4, 4>, scalar_prefetch = 2 : i64, scratch_operands = 0 : i64, tpu.core_type = #tpu.core_type<tc>, window_params = [{transform_indices = @transform_0, window_bounds = array<i64: 128, 128>}, {transform_indices = @transform_1, window_bounds = array<i64: 128, 128>}, {pipeline_mode = #tpu.pipeline_mode<synchronous>, transform_indices = @transform_2, window_bounds = array<i64: 1, 128>}, {transform_indices = @transform_3, window_bounds = array<i64: 128, 128>}]} {
    %c0_i32 = arith.constant 0 : i32
    %0 = arith.cmpi eq, %arg1, %c0_i32 : i32
    %1 = arith.extui %0 : i1 to i32
    %c0_i32_0 = arith.constant 0 : i32
    %2 = arith.cmpi ne, %1, %c0_i32_0 : i32
    scf.if %2 {
      %cst = arith.constant 0.000000e+00 : f32
      %11 = vector.broadcast %cst : f32 to vector<128x128xf32>
      %c0 = arith.constant 0 : index
      %c0_3 = arith.constant 0 : index
      %12 = vector.load %arg7[%c0, %c0_3] : memref<128x128xf32, #tpu.memory_space<vmem>>, vector<128x128xf32>
      tpu.vector_store %arg7[%c0, %c0_3], %11 {strides = array<i32>} : memref<128x128xf32, #tpu.memory_space<vmem>>, vector<128x128xf32>,
    } else {
    }
    %3 = arith.index_cast %arg0 : i32 to index
    %4 = memref.load %arg2[%3] : memref<4xi32, #tpu.memory_space<smem>>
    %5 = arith.cmpi slt, %arg1, %4 : i32
    %6 = arith.extui %5 : i1 to i32
    %c0_i32_1 = arith.constant 0 : i32
    %7 = arith.cmpi ne, %6, %c0_i32_1 : i32
    scf.if %7 {
      %c0 = arith.constant 0 : index
      %c0_3 = arith.constant 0 : index
      %11 = vector.load %arg7[%c0, %c0_3] : memref<128x128xf32, #tpu.memory_space<vmem>>, vector<128x128xf32>
      %c0_4 = arith.constant 0 : index
      %c0_5 = arith.constant 0 : index
      %12 = vector.load %arg4[%c0_4, %c0_5] : memref<128x128xbf16, #tpu.memory_space<vmem>>, vector<128x128xbf16>
      %c0_6 = arith.constant 0 : index
      %c0_7 = arith.constant 0 : index
      %13 = vector.load %arg5[%c0_6, %c0_7] : memref<128x128xbf16, #tpu.memory_space<vmem>>, vector<128x128xbf16>
      %cst = arith.constant dense<0.000000e+00> : vector<128x128xf32>
      %14 = tpu.matmul %12, %13, %cst {dimension_numbers = #tpu.dot_dimension_numbers<[1], [0], [0], [1], [0, 0, 1, 1], [], []>} : vector<128x128xbf16>, vector<128x128xbf16>, vector<128x128xf32> -> vector<128x128xf32>
      %15 = arith.addf %11, %14 : vector<128x128xf32>
      %c0_8 = arith.constant 0 : index
      %c0_9 = arith.constant 0 : index
      %16 = vector.load %arg7[%c0_8, %c0_9] : memref<128x128xf32, #tpu.memory_space<vmem>>, vector<128x128xf32>
      tpu.vector_store %arg7[%c0_8, %c0_9], %15 {strides = array<i32>} : memref<128x128xf32, #tpu.memory_space<vmem>>, vector<128x128xf32>,
    } else {
    }
    %c3_i32 = arith.constant 3 : i32
    %8 = arith.cmpi eq, %arg1, %c3_i32 : i32
    %9 = arith.extui %8 : i1 to i32
    %c0_i32_2 = arith.constant 0 : i32
    %10 = arith.cmpi ne, %9, %c0_i32_2 : i32
    scf.if %10 {
      %c0 = arith.constant 0 : index
      %c0_3 = arith.constant 0 : index
      %11 = vector.load %arg7[%c0, %c0_3] : memref<128x128xf32, #tpu.memory_space<vmem>>, vector<128x128xf32>
      %c0_4 = arith.constant 0 : index
      %c0_5 = arith.constant 0 : index
      %12 = vector.load %arg6[%c0_4, %c0_5] : memref<1x128xf32, #tpu.memory_space<vmem>>, vector<1x128xf32>
      %13 = vector.broadcast %12 : vector<1x128xf32> to vector<128x128xf32>
      %14 = arith.addf %11, %13 : vector<128x128xf32>
      %c0_6 = arith.constant 0 : index
      %c0_7 = arith.constant 0 : index
      %15 = vector.load %arg7[%c0_6, %c0_7] : memref<128x128xf32, #tpu.memory_space<vmem>>, vector<128x128xf32>
      tpu.vector_store %arg7[%c0_6, %c0_7], %14 {strides = array<i32>} : memref<128x128xf32, #tpu.memory_space<vmem>>, vector<128x128xf32>,
    } else {
    }
    return
  }
  func.func @transform_0(%arg0: i32, %arg1: i32, %arg2: memref<4xi32, #tpu.memory_space<smem>>, %arg3: memref<4x4xi32, #tpu.memory_space<smem>>) -> (i32, i32) {
    %0 = arith.index_cast %arg0 : i32 to index
    %1 = arith.index_cast %arg1 : i32 to index
    %2 = memref.load %arg3[%0, %1] : memref<4x4xi32, #tpu.memory_space<smem>>
    %c0_i32 = arith.constant 0 : i32
    return %arg0, %2 : i32, i32
  }
  func.func @transform_1(%arg0: i32, %arg1: i32, %arg2: memref<4xi32, #tpu.memory_space<smem>>, %arg3: memref<4x4xi32, #tpu.memory_space<smem>>) -> (i32, i32) {
    %0 = arith.index_cast %arg0 : i32 to index
    %1 = arith.index_cast %arg1 : i32 to index
    %2 = memref.load %arg3[%0, %1] : memref<4x4xi32, #tpu.memory_space<smem>>
    %c0_i32 = arith.constant 0 : i32
    %c0_i32_0 = arith.constant 0 : i32
    return %2, %c0_i32 : i32, i32
  }
  func.func @transform_2(%arg0: i32, %arg1: i32, %arg2: memref<4xi32, #tpu.memory_space<smem>>, %arg3: memref<4x4xi32, #tpu.memory_space<smem>>) -> (i32, i32) {
    %c0_i32 = arith.constant 0 : i32
    %c0_i32_0 = arith.constant 0 : i32
    %c0_i32_1 = arith.constant 0 : i32
    return %c0_i32, %c0_i32_0 : i32, i32
  }
  func.func @transform_3(%arg0: i32, %arg1: i32, %arg2: memref<4xi32, #tpu.memory_space<smem>>, %arg3: memref<4x4xi32, #tpu.memory_space<smem>>) -> (i32, i32) {
    %c0_i32 = arith.constant 0 : i32
    %c0_i32_0 = arith.constant 0 : i32
    return %arg0, %c0_i32 : i32, i32
  }
}

</mosaic_0001>

<llo_original>
// kernel: gcn_forward.4
$region0: #{gcn_forward.4}
  #allocation0 [shape = 'u32[]', space=smem, size = 0x4, offset = 0x4, fixed_abs, tag = 'smem constant byte address 0x4 - core index']
  #allocation1 [shape = 'u32[144,128]{1,0:T(1,128)}', space=vmem, size = 0x12000, scoped, tag = 'internal scratch']
  #allocation2 [shape = 'f32[128,128]{1,0:T(8,128)}', space=vmem, size = 0x10000, scoped, tag = 'scratch operand']
  #allocation3 [shape = 's32[1]{0}', space=sflag, size = 0x4, scoped, tag = 'scoped memory for gcn_forward.4']
  #allocation4 [shape = 'u8[512]{0}', space=smem, size = 0x200, scoped, tag = 'prefetched SMEM operand 0']
  #allocation5 [shape = 'u8[2048]{0}', space=smem, size = 0x800, scoped, tag = 'prefetched SMEM operand 1']
  %s0 = inlined_call_operand.vmem [shape: s32[4], index: 0, kind: input, shape index: {}]
  %s1 = inlined_call_operand.vmem [shape: s32[4,4], index: 1, kind: input, shape index: {}]
  %s2 = inlined_call_operand.vmem [shape: bf16[512,512], index: 2, kind: input, shape index: {}]
  %s3 = inlined_call_operand.vmem [shape: bf16[512,128], index: 3, kind: input, shape index: {}]
  %s4 = inlined_call_operand.vmem [shape: bf16[128,128], index: 4, kind: input, shape index: {}]
  %s5 = inlined_call_operand.vmem [shape: f32[1,128], index: 5, kind: input, shape index: {}]
  %s6 = inlined_call_operand.vmem [shape: bf16[512,128], index: 6, kind: output, shape index: {}]
  %s7 = sld [smem:[#allocation0]]
  $region102: #{gcn_forward.4} parent=0
    _
  %s9 = ssub.s32 1, %s7
  %s10 = scalar_select 0, %s9, %s7
  %s11 = sshll.u32 %s0, 4
  %s12 = int_to_ptr.vmem [resolvable:$true] %s11
  %14 = dma.vmem_to_smem %s12, 16, [#allocation4], [#allocation3]
  %s15 = sshll.u32 %s1, 4
  %s16 = int_to_ptr.vmem [resolvable:$true] %s15
  %18 = dma.vmem_to_smem %s16, 64, [#allocation5], [#allocation3]
  %19 = dma.done [#allocation3], 80
  %20 = sfence
  $region1: #{gcn_forward.4} parent=0
    #allocation6 [shape = 'u8[65536]{0}', space=vmem, size = 0x10000, scoped, tag = 'input window, operand 2']
    loop: start=0, step=1, limit=18
    $region2: #{gcn_forward.4} parent=1 // loop_pre_header
      _
    $region3: #{gcn_forward.4} parent=1 // loop_header
      %s22 = sphi 0, %s26
      %p23 = scmp.ge.s32.totalorder %s22, 18
      %s29 = sphi 0, %s41
      %s30 = sphi 0, %s37
      %s31 = sphi 0, %s29
      %s32 = sphi 0, %s30
      %s33 = sphi 0, %s31
      %s34 = sphi 0, %s32
      %s62 = sphi 0, %s64
      %s65 = sphi 0, %s62
      %s66 = sphi 0, %s65
      %s82 = sphi 0, %s66
      %s104 = sphi 0, %s106
      %s107 = sphi 0, %s104
      %s108 = sphi 0, %s107
      %s124 = sphi 0, %s108
      %s128 = sphi 0, %s128
      %s130 = sphi 0, %s128
      %s131 = sphi 0, %s130
      %s145 = sphi 0, %s131
      %s149 = sphi 0, %s149
      %s151 = sphi 0, %s149
      %s152 = sphi 0, %s151
      %s166 = sphi 0, %s152
      %s172 = sphi 0, %s174
      %s175 = sphi 0, %s172
      %s176 = sphi 0, %s175
      %s192 = sphi 0, %s176
    $region4: #{gcn_forward.4} parent=1 // loop_header_branch
      %25 = sbr.rel (%p23) target = $region8
    $region5: #{gcn_forward.4} parent=1 // loop_body
      %s27 = ssub.s32 %s22, 1
      %s28 = ssub.s32 %s22, 2
      %s35 = sadd.s32 1, %s30
      %p36 = scmp.ge.s32.totalorder %s35, 4
      %s37 = scalar_select %p36, 0, %s35
      %s38 = sadd.s32 1, %s29
      %s39 = scalar_select %p36, %s38, %s29
      %p40 = scmp.ge.s32.totalorder %s39, 4
      %s41 = scalar_select %p40, 0, %s39
      %s42 = sshra.s32 %s30, 7
      %s43 = sand.u32 %s30, 127
      %s44 = sadd.s32 %s42, %s29
      %s45 = smul.u32 %s44, 128
      %s46 = sshra.s32 %s30, 7
      %s47 = sand.u32 %s30, 127
      %s48 = sadd.s32 %s45, %s47
      %s49 = sld [smem:[#allocation5 + %s48]]
      %s50 = sshra.s32 %s37, 7
      %s51 = sand.u32 %s37, 127
      %s52 = sadd.s32 %s50, %s41
      %s53 = smul.u32 %s52, 128
      %s54 = sshra.s32 %s37, 7
      %s55 = sand.u32 %s37, 127
      %s56 = sadd.s32 %s53, %s55
      %s57 = sld [smem:[#allocation5 + %s56]]
      %s58 = ssub.s32 %s29, %s41
      %s59 = ssub.s32 %s49, %s57
      %s60 = sor.u32 %s58, %s59
      %p61 = scmp.eq.s32.totalorder %s60, 0
      %s63 = sadd.s32 %s62, 1
      %s64 = scalar_select %p61, %s62, %s63
      %p67 = pneg %p61
      %p68 = scmp.eq.s32.totalorder %s22, 15
      %p69 = por %p67, %p68
      %p70 = scmp.ne.s32.totalorder %s62, %s65
      %p71 = scmp.eq.s32.totalorder %s22, 0
      %p72 = por %p70, %p71
      %p73 = scmp.ne.s32.totalorder %s62, %s65
      %p74 = scmp.eq.s32.totalorder %s27, 15
      %p75 = por %p73, %p74
      %p76 = scmp.ne.s32.totalorder %s65, %s66
      %p77 = scmp.eq.s32.totalorder %s27, 0
      %p78 = por %p76, %p77
      %p79 = scmp.ne.s32.totalorder %s65, %s66
      %p80 = scmp.eq.s32.totalorder %s28, 15
      %p81 = por %p79, %p80
      %p83 = scmp.ne.s32.totalorder %s66, %s82
      %p84 = scmp.eq.s32.totalorder %s28, 0
      %p85 = por %p83, %p84
      %s86 = sshra.s32 %s30, 7
      %s87 = sand.u32 %s30, 127
      %s88 = sadd.s32 %s86, %s29
      %s89 = smul.u32 %s88, 128
      %s90 = sshra.s32 %s30, 7
      %s91 = sand.u32 %s30, 127
      %s92 = sadd.s32 %s89, %s91
      %s93 = sld [smem:[#allocation5 + %s92]]
      %s94 = sshra.s32 %s37, 7
      %s95 = sand.u32 %s37, 127
      %s96 = sadd.s32 %s94, %s41
      %s97 = smul.u32 %s96, 128
      %s98 = sshra.s32 %s37, 7
      %s99 = sand.u32 %s37, 127
      %s100 = sadd.s32 %s97, %s99
      %s101 = sld [smem:[#allocation5 + %s100]]
      %s102 = ssub.s32 %s93, %s101
      %p103 = scmp.eq.s32.totalorder %s102, 0
      %s105 = sadd.s32 %s104, 1
      %s106 = scalar_select %p103, %s104, %s105
      %p109 = pneg %p103
      %p110 = scmp.eq.s32.totalorder %s22, 15
      %p111 = por %p109, %p110
      %p112 = scmp.ne.s32.totalorder %s104, %s107
      %p113 = scmp.eq.s32.totalorder %s22, 0
      %p114 = por %p112, %p113
      %p115 = scmp.ne.s32.totalorder %s104, %s107
      %p116 = scmp.eq.s32.totalorder %s27, 15
      %p117 = por %p115, %p116
      %p118 = scmp.ne.s32.totalorder %s107, %s108
      %p119 = scmp.eq.s32.totalorder %s27, 0
      %p120 = por %p118, %p119
      %p121 = scmp.ne.s32.totalorder %s107, %s108
      %p122 = scmp.eq.s32.totalorder %s28, 15
      %p123 = por %p121, %p122
      %p125 = scmp.ne.s32.totalorder %s108, %s124
      %p126 = scmp.eq.s32.totalorder %s28, 0
      %p127 = por %p125, %p126
      %s129 = sadd.s32 %s128, 1
      %p132 = scmp.eq.s32.totalorder %s22, 15
      %p133 = scmp.ne.s32.totalorder %s128, %s130
      %p134 = scmp.eq.s32.totalorder %s22, 0
      %p135 = por %p133, %p134
      %p136 = scmp.ne.s32.totalorder %s128, %s130
      %p137 = scmp.eq.s32.totalorder %s27, 15
      %p138 = por %p136, %p137
      %p139 = scmp.ne.s32.totalorder %s130, %s131
      %p140 = scmp.eq.s32.totalorder %s27, 0
      %p141 = por %p139, %p140
      %p142 = scmp.ne.s32.totalorder %s130, %s131
      %p143 = scmp.eq.s32.totalorder %s28, 15
      %p144 = por %p142, %p143
      %p146 = scmp.ne.s32.totalorder %s131, %s145
      %p147 = scmp.eq.s32.totalorder %s28, 0
      %p148 = por %p146, %p147
      %s150 = sadd.s32 %s149, 1
      %p153 = scmp.eq.s32.totalorder %s22, 15
      %p154 = scmp.ne.s32.totalorder %s149, %s151
      %p155 = scmp.eq.s32.totalorder %s22, 0
      %p156 = por %p154, %p155
      %p157 = scmp.ne.s32.totalorder %s149, %s151
      %p158 = scmp.eq.s32.totalorder %s27, 15
      %p159 = por %p157, %p158
      %p160 = scmp.ne.s32.totalorder %s151, %s152
      %p161 = scmp.eq.s32.totalorder %s27, 0
      %p162 = por %p160, %p161
      %p163 = scmp.ne.s32.totalorder %s151, %s152
      %p164 = scmp.eq.s32.totalorder %s28, 15
      %p165 = por %p163, %p164
      %p167 = scmp.ne.s32.totalorder %s152, %s166
      %p168 = scmp.eq.s32.totalorder %s28, 0
      %p169 = por %p167, %p168
      %s170 = ssub.s32 %s29, %s41
      %p171 = scmp.eq.s32.totalorder %s170, 0
      %s173 = sadd.s32 %s172, 1
      %s174 = scalar_select %p171, %s172, %s173
      %p177 = pneg %p171
      %p178 = scmp.eq.s32.totalorder %s22, 15
      %p179 = por %p177, %p178
      %p180 = scmp.ne.s32.totalorder %s172, %s175
      %p181 = scmp.eq.s32.totalorder %s22, 0
      %p182 = por %p180, %p181
      %p183 = scmp.ne.s32.totalorder %s172, %s175
      %p184 = scmp.eq.s32.totalorder %s27, 15
      %p185 = por %p183, %p184
      %p186 = scmp.ne.s32.totalorder %s175, %s176
      %p187 = scmp.eq.s32.totalorder %s27, 0
      %p188 = por %p186, %p187
      %p189 = scmp.ne.s32.totalorder %s175, %s176
      %p190 = scmp.eq.s32.totalorder %s28, 15
      %p191 = por %p189, %p190
      %p193 = scmp.ne.s32.totalorder %s176, %s192
      %p194 = scmp.eq.s32.totalorder %s28, 0
      %p195 = por %p193, %p194
      %p196 = scmp.le.s32.totalorder 1, %s22
      %p197 = scmp.lt.s32.totalorder %s22, 17
      %p198 = pnand %p196, %p197
      %p199 = pneg %p198
      // Predicated region
      $region9: #{gcn_forward.4} parent=5 // pred_check
        _
      $region10: #{gcn_forward.4} parent=5 // pred_check_branch
        %201 = sbr.rel (%p198) target = $region12
      $region11: #{gcn_forward.4} parent=5 // pred_region
        %s202 = ssub.s32 %s22, 1
        // Predicated region
        $region13: #{gcn_forward.4} parent=11 // pred_check
          %p203 = pneg %p141
        $region14: #{gcn_forward.4} parent=11 // pred_check_branch
          %205 = sbr.rel (%p203) target = $region16
        $region15: #{gcn_forward.4} parent=11 // pred_region
          _
        $region16: #{gcn_forward.4} parent=11 // pred_fallthru
          _
        // Predicated region
        $region17: #{gcn_forward.4} parent=11 // pred_check
          %p206 = pneg %p162
        $region18: #{gcn_forward.4} parent=11 // pred_check_branch
          %208 = sbr.rel (%p206) target = $region20
        $region19: #{gcn_forward.4} parent=11 // pred_region
          _
        $region20: #{gcn_forward.4} parent=11 // pred_fallthru
          _
      $region12: #{gcn_forward.4} parent=5 // pred_fallthru
        _
      %p209 = scmp.lt.s32.totalorder %s22, 16
      // Predicated region
      $region21: #{gcn_forward.4} parent=5 // pred_check
        %p210 = pneg %p209
      $region22: #{gcn_forward.4} parent=5 // pred_check_branch
        %212 = sbr.rel (%p210) target = $region24
      $region23: #{gcn_forward.4} parent=5 // pred_region
        // Predicated region
        $region25: #{gcn_forward.4} parent=23 // pred_check
          %p213 = pneg %p72
        $region26: #{gcn_forward.4} parent=23 // pred_check_branch
          %215 = sbr.rel (%p213) target = $region28
        $region27: #{gcn_forward.4} parent=23 // pred_region
          %s216 = sand.u32 %s62, 1
          %s217 = sand.u32 %s62, 1
          %s218 = smul.addr %s217, 64
          %s219 = scalar_lea.vmem [#allocation6], %s218
          %s220 = sshra.s32 %s30, 7
          %s221 = sand.u32 %s30, 127
          %s222 = sadd.s32 %s220, %s29
          %s223 = smul.u32 %s222, 128
          %s224 = sshra.s32 %s30, 7
          %s225 = sand.u32 %s30, 127
          %s226 = sadd.s32 %s223, %s225
          %s227 = sld [smem:[#allocation5 + %s226]]
          %s228 = smul.u32 16, %s29
          %s229 = smul.addr %s228, 4
          %s230 = sadd.s32 %s227, %s229
          %s231 = smul.addr %s230, 4
          %s232 = scalar_lea.vmem %s2, %s231
          // Predicated region
          $region29: #{gcn_forward.4} parent=27 // pred_check
            _
          $region30: #{gcn_forward.4} parent=27 // pred_check_branch
            %234 = sbr.rel (0) target = $region32
          $region31: #{gcn_forward.4} parent=27 // pred_region
            // Predicated region
            $region33: #{gcn_forward.4} parent=31 // pred_check
              _
            $region34: #{gcn_forward.4} parent=31 // pred_check_branch
              %236 = sbr.rel target = $region36
            $region35: #{gcn_forward.4} parent=31 // pred_region
              // Predicated region
              $region48: #{gcn_forward.4} parent=35 // pred_check
                _
              $region49: #{gcn_forward.4} parent=35 // pred_check_branch
                %282 = sbr.rel (0) target = $region51
              $region50: #{gcn_forward.4} parent=35 // pred_region
                loop: start=0, step=1, limit=1
                $region52: #{gcn_forward.4} parent=50 // loop_pre_header
                  _
                $region53: #{gcn_forward.4} parent=50 // loop_header
                  %s284 = sphi 0, %s288
                  %p285 = scmp.ge.s32.totalorder %s284, 1
                  %s289 = sphi %s232, %s232
                  %s290 = sphi %s219, %s219
                $region54: #{gcn_forward.4} parent=50 // loop_header_branch
                  %287 = sbr.rel (%p285) target = $region58
                $region55: #{gcn_forward.4} parent=50 // loop_body
                  _
                $region56: #{gcn_forward.4} parent=50 // loop_footer
                  %s288 = sadd.s32 1, %s284
                $region57: #{gcn_forward.4} parent=50 // loop_footer_branch
                  %283 = sbr.rel target = $region53
                $region58: #{gcn_forward.4} parent=50 // loop_exit
                  _
                %s292 = ssub.s32 16, 1
                loop: start=0, step=1, limit=1
                $region59: #{gcn_forward.4} parent=50 // loop_pre_header
                  _
                $region60: #{gcn_forward.4} parent=50 // loop_header
                  %s294 = sphi 0, %s298
                  %p295 = scmp.ge.s32.totalorder %s294, 1
                  %s299 = sphi %s232, %s232
                  %s300 = sphi %s219, %s219
                $region61: #{gcn_forward.4} parent=50 // loop_header_branch
                  %297 = sbr.rel (%p295) target = $region65
                $region62: #{gcn_forward.4} parent=50 // loop_body
                  %v301 = vld [vmem:[%s299] sm:%s292]
                  %302 = vst [vmem:[%s300] sm:%s292] %v301
                  %v303 = vld [vmem:[%s299 + $0x10] sm:%s292]
                  %304 = vst [vmem:[%s300 + $0x4] sm:%s292] %v303
                  %v305 = vld [vmem:[%s299 + $0x20] sm:%s292]
                  %306 = vst [vmem:[%s300 + $0x8] sm:%s292] %v305
                  %v307 = vld [vmem:[%s299 + $0x30] sm:%s292]
                  %308 = vst [vmem:[%s300 + $0xc] sm:%s292] %v307
                  %v309 = vld [vmem:[%s299 + $0x40] sm:%s292]
                  %310 = vst [vmem:[%s300 + $0x10] sm:%s292] %v309
                  %v311 = vld [vmem:[%s299 + $0x50] sm:%s292]
                  %312 = vst [vmem:[%s300 + $0x14] sm:%s292] %v311
                  %v313 = vld [vmem:[%s299 + $0x60] sm:%s292]
                  %314 = vst [vmem:[%s300 + $0x18] sm:%s292] %v313
                  %v315 = vld [vmem:[%s299 + $0x70] sm:%s292]
                  %316 = vst [vmem:[%s300 + $0x1c] sm:%s292] %v315
                  %v317 = vld [vmem:[%s299 + $0x80] sm:%s292]
                  %318 = vst [vmem:[%s300 + $0x20] sm:%s292] %v317
                  %v319 = vld [vmem:[%s299 + $0x90] sm:%s292]
                  %320 = vst [vmem:[%s300 + $0x24] sm:%s292] %v319
                  %v321 = vld [vmem:[%s299 + $0xa0] sm:%s292]
                  %322 = vst [vmem:[%s300 + $0x28] sm:%s292] %v321
                  %v323 = vld [vmem:[%s299 + $0xb0] sm:%s292]
                  %324 = vst [vmem:[%s300 + $0x2c] sm:%s292] %v323
                  %v325 = vld [vmem:[%s299 + $0xc0] sm:%s292]
                  %326 = vst [vmem:[%s300 + $0x30] sm:%s292] %v325
                  %v327 = vld [vmem:[%s299 + $0xd0] sm:%s292]
                  %328 = vst [vmem:[%s300 + $0x34] sm:%s292] %v327
                  %v329 = vld [vmem:[%s299 + $0xe0] sm:%s292]
                  %330 = vst [vmem:[%s300 + $0x38] sm:%s292] %v329
                  %v331 = vld [vmem:[%s299 + $0xf0] sm:%s292]
                  %332 = vst [vmem:[%s300 + $0x3c] sm:%s292] %v331
                $region63: #{gcn_forward.4} parent=50 // loop_footer
                  %s298 = sadd.s32 1, %s294
                $region64: #{gcn_forward.4} parent=50 // loop_footer_branch
                  %293 = sbr.rel target = $region60
                $region65: #{gcn_forward.4} parent=50 // loop_exit
                  _
              $region51: #{gcn_forward.4} parent=35 // pred_fallthru
                _
            $region36: #{gcn_forward.4} parent=31 // pred_fallthru
              _
            // Predicated region
            $region37: #{gcn_forward.4} parent=31 // pred_check
              _
            $region38: #{gcn_forward.4} parent=31 // pred_check_branch
              %238 = sbr.rel (0) target = $region40
            $region39: #{gcn_forward.4} parent=31 // pred_region
              %s240 = ssub.s32 16, 1
              loop: start=0, step=1, limit=1
              $region41: #{gcn_forward.4} parent=39 // loop_pre_header
                _
              $region42: #{gcn_forward.4} parent=39 // loop_header
                %s242 = sphi 0, %s246
                %p243 = scmp.ge.s32.totalorder %s242, 1
                %s247 = sphi %s232, %s232
                %s248 = sphi %s219, %s219
              $region43: #{gcn_forward.4} parent=39 // loop_header_branch
                %245 = sbr.rel (%p243) target = $region47
              $region44: #{gcn_forward.4} parent=39 // loop_body
                %v249 = vld [vmem:[%s247] sm:%s240]
                %250 = vst [vmem:[%s248] sm:%s240] %v249
                %v251 = vld [vmem:[%s247 + $0x10] sm:%s240]
                %252 = vst [vmem:[%s248 + $0x4] sm:%s240] %v251
                %v253 = vld [vmem:[%s247 + $0x20] sm:%s240]
                %254 = vst [vmem:[%s248 + $0x8] sm:%s240] %v253
                %v255 = vld [vmem:[%s247 + $0x30] sm:%s240]
                %256 = vst [vmem:[%s248 + $0xc] sm:%s240] %v255
                %v257 = vld [vmem:[%s247 + $0x40] sm:%s240]
                %258 = vst [vmem:[%s248 + $0x10] sm:%s240] %v257
                %v259 = vld [vmem:[%s247 + $0x50] sm:%s240]
                %260 = vst [vmem:[%s248 + $0x14] sm:%s240] %v259
                %v261 = vld [vmem:[%s247 + $0x60] sm:%s240]
                %262 = vst [vmem:[%s248 + $0x18] sm:%s240] %v261
                %v263 = vld [vmem:[%s247 + $0x70] sm:%s240]
                %264 = vst [vmem:[%s248 + $0x1c] sm:%s240] %v263
                %v265 = vld [vmem:[%s247 + $0x80] sm:%s240]
                %266 = vst [vmem:[%s248 + $0x20] sm:%s240] %v265
                %v267 = vld [vmem:[%s247 + $0x90] sm:%s240]
                %268 = vst [vmem:[%s248 + $0x24] sm:%s240] %v267
                %v269 = vld [vmem:[%s247 + $0xa0] sm:%s240]
                %270 = vst [vmem:[%s248 + $0x28] sm:%s240] %v269
                %v271 = vld [vmem:[%s247 + $0xb0] sm:%s240]
                %272 = vst [vmem:[%s248 + $0x2c] sm:%s240] %v271
                %v273 = vld [vmem:[%s247 + $0xc0] sm:%s240]
                %274 = vst [vmem:[%s248 + $0x30] sm:%s240] %v273
                %v275 = vld [vmem:[%s247 + $0xd0] sm:%s240]
                %276 = vst [vmem:[%s248 + $0x34] sm:%s240] %v275
                %v277 = vld [vmem:[%s247 + $0xe0] sm:%s240]
                %278 = vst [vmem:[%s248 + $0x38] sm:%s240] %v277
                %v279 = vld [vmem:[%s247 + $0xf0] sm:%s240]
                %280 = vst [vmem:[%s248 + $0x3c] sm:%s240] %v279
              $region45: #{gcn_forward.4} parent=39 // loop_footer
                %s246 = sadd.s32 1, %s242
              $region46: #{gcn_forward.4} parent=39 // loop_footer_branch
                %241 = sbr.rel target = $region42
              $region47: #{gcn_forward.4} parent=39 // loop_exit
                _
            $region40: #{gcn_forward.4} parent=31 // pred_fallthru
              _
          $region32: #{gcn_forward.4} parent=27 // pred_fallthru
            _
          %333 = vnop
        $region28: #{gcn_forward.4} parent=23 // pred_fallthru
          _
        // Predicated region
        $region66: #{gcn_forward.4} parent=23 // pred_check
          %p334 = pneg %p114
        $region67: #{gcn_forward.4} parent=23 // pred_check_branch
          %336 = sbr.rel (%p334) target = $region69
        $region68: #{gcn_forward.4} parent=23 // pred_region
          %s337 = sshra.s32 %s30, 7
          %s338 = sand.u32 %s30, 127
          %s339 = sadd.s32 %s337, %s29
          %s340 = smul.u32 %s339, 128
          %s341 = sshra.s32 %s30, 7
          %s342 = sand.u32 %s30, 127
          %s343 = sadd.s32 %s340, %s342
          %s344 = sld [smem:[#allocation5 + %s343]]
          %s345 = smul.u32 16, %s344
          %p346 = scmp.lt.s32.totalorder %s345, 63
          %s347 = scalar_select %p346, %s345, 63
          %s348 = smul.addr %s347, 4
          %s349 = scalar_lea.vmem %s3, %s348
          %s350 = sshra.s32 %s30, 7
          %s351 = sand.u32 %s30, 127
          %s352 = sadd.s32 %s350, %s29
          %s353 = smul.u32 %s352, 128
          %s354 = sshra.s32 %s30, 7
          %s355 = sand.u32 %s30, 127
          %s356 = sadd.s32 %s353, %s355
          %s357 = sld [smem:[#allocation5 + %s356]]
          %s358 = smul.u32 16, %s357
        $region69: #{gcn_forward.4} parent=23 // pred_fallthru
          _
      $region24: #{gcn_forward.4} parent=5 // pred_fallthru
        _
      %p359 = scmp.le.s32.totalorder 1, %s22
      %p360 = scmp.lt.s32.totalorder %s22, 17
      %p361 = pnand %p359, %p360
      %p362 = pneg %p361
      // Predicated region
      $region70: #{gcn_forward.4} parent=5 // pred_check
        _
      $region71: #{gcn_forward.4} parent=5 // pred_check_branch
        %364 = sbr.rel (%p361) target = $region73
      $region72: #{gcn_forward.4} parent=5 // pred_region
        %s365 = ssub.s32 %s22, 1
        %s366 = sand.u32 %s65, 1
        %s367 = sand.u32 %s65, 1
        %s368 = smul.addr %s367, 64
        %s369 = scalar_lea.vmem [#allocation6], %s368
        // Predicated region
        $region74: #{gcn_forward.4} parent=72 // pred_check
          %p370 = pneg %p78
        $region75: #{gcn_forward.4} parent=72 // pred_check_branch
          %372 = sbr.rel (%p370) target = $region77
        $region76: #{gcn_forward.4} parent=72 // pred_region
          _
        $region77: #{gcn_forward.4} parent=72 // pred_fallthru
          _
        %s373 = sand.u32 %s65, 1
        %s374 = sand.u32 %s65, 1
        %s375 = smul.addr %s374, 64
        %s376 = scalar_lea.vmem [#allocation6], %s375
        %p377 = pneg %p78
        %p378 = pneg %p75
        %s379 = sshra.s32 %s32, 7
        %s380 = sand.u32 %s32, 127
        %s381 = sadd.s32 %s379, %s31
        %s382 = smul.u32 %s381, 128
        %s383 = sshra.s32 %s32, 7
        %s384 = sand.u32 %s32, 127
        %s385 = sadd.s32 %s382, %s384
        %s386 = sld [smem:[#allocation5 + %s385]]
        %s387 = smul.u32 16, %s386
        %p388 = scmp.lt.s32.totalorder %s387, 63
        %s389 = scalar_select %p388, %s387, 63
        %s390 = smul.addr %s389, 4
        %s391 = scalar_lea.vmem %s3, %s390
        %p392 = pneg %p120
        %p393 = pneg %p117
        %p394 = pneg %p141
        %p395 = pneg %p138
        %p396 = pneg %p162
        %p397 = pneg %p159
        %p398 = pneg %p188
        %p399 = pneg %p185
        %s400 = smul.u32 16, %s31
        %p401 = scmp.lt.s32.totalorder %s400, 63
        %s402 = scalar_select %p401, %s400, 63
        %s403 = smul.addr %s402, 4
        %s404 = scalar_lea.vmem %s6, %s403
        %s405 = sshra.s32 %s32, 7
        %s406 = sand.u32 %s32, 127
        %s407 = sadd.s32 %s405, %s31
        %s408 = smul.u32 %s407, 128
        %s409 = sshra.s32 %s32, 7
        %s410 = sand.u32 %s32, 127
        %s411 = sadd.s32 %s408, %s410
        %s412 = sld [smem:[#allocation5 + %s411]]
        %s413 = smul.u32 16, %s31
        %s414 = sshra.s32 %s32, 7
        %s415 = sand.u32 %s32, 127
        %s416 = sadd.s32 %s414, %s31
        %s417 = smul.u32 %s416, 128
        %s418 = sshra.s32 %s32, 7
        %s419 = sand.u32 %s32, 127
        %s420 = sadd.s32 %s417, %s419
        %s421 = sld [smem:[#allocation5 + %s420]]
        %s422 = smul.u32 16, %s421
        %p423 = scmp.lt.s32.totalorder %s422, 63
        %s424 = scalar_select %p423, %s422, 63
        %s425 = smul.addr %s424, 4
        %s426 = scalar_lea.vmem %s3, %s425
        %s427 = sshra.s32 %s32, 7
        %s428 = sand.u32 %s32, 127
        %s429 = sadd.s32 %s427, %s31
        %s430 = smul.u32 %s429, 128
        %s431 = sshra.s32 %s32, 7
        %s432 = sand.u32 %s32, 127
        %s433 = sadd.s32 %s430, %s432
        %s434 = sld [smem:[#allocation5 + %s433]]
        %s435 = smul.u32 16, %s434
        %s436 = smul.u32 16, %s31
        %p437 = scmp.lt.s32.totalorder %s436, 63
        %s438 = scalar_select %p437, %s436, 63
        %s439 = smul.addr %s438, 4
        %s440 = scalar_lea.vmem %s6, %s439
        %s441 = smul.u32 16, %s31
        %p443 = scmp.eq.s32.totalorder %s32, 0
        // Predicated region
        $region78: #{gcn_forward.4} parent=72 // pred_check
          %p444 = pneg %p443
        $region79: #{gcn_forward.4} parent=72 // pred_check_branch
          %446 = sbr.rel (%p444) target = $region81
        $region80: #{gcn_forward.4} parent=72 // pred_region
          %447 = vst [vmem:[#allocation2] sm:$0xff] 0.0
          %448 = vst [vmem:[#allocation2 + $0x8] sm:$0xff] 0.0
          %449 = vst [vmem:[#allocation2 + $0x10] sm:$0xff] 0.0
          %450 = vst [vmem:[#allocation2 + $0x18] sm:$0xff] 0.0
          %451 = vst [vmem:[#allocation2 + $0x20] sm:$0xff] 0.0
          %452 = vst [vmem:[#allocation2 + $0x28] sm:$0xff] 0.0
          %453 = vst [vmem:[#allocation2 + $0x30] sm:$0xff] 0.0
          %454 = vst [vmem:[#allocation2 + $0x38] sm:$0xff] 0.0
          %455 = vst [vmem:[#allocation2 + $0x40] sm:$0xff] 0.0
          %456 = vst [vmem:[#allocation2 + $0x48] sm:$0xff] 0.0
          %457 = vst [vmem:[#allocation2 + $0x50] sm:$0xff] 0.0
          %458 = vst [vmem:[#allocation2 + $0x58] sm:$0xff] 0.0
          %459 = vst [vmem:[#allocation2 + $0x60] sm:$0xff] 0.0
          %460 = vst [vmem:[#allocation2 + $0x68] sm:$0xff] 0.0
          %461 = vst [vmem:[#allocation2 + $0x70] sm:$0xff] 0.0
          %462 = vst [vmem:[#allocation2 + $0x78] sm:$0xff] 0.0
        $region81: #{gcn_forward.4} parent=72 // pred_fallthru
          _
        %s463 = sld [smem:[#allocation4 + %s31]]
        %p464 = scmp.lt.s32.totalorder %s32, %s463
        // Predicated region
        $region82: #{gcn_forward.4} parent=72 // pred_check
          %p465 = pneg %p464
        $region83: #{gcn_forward.4} parent=72 // pred_check_branch
          %467 = sbr.rel (%p465) target = $region85
        $region84: #{gcn_forward.4} parent=72 // pred_region
          %v468 = vld [vmem:[#allocation2] sm:$0xff]
          %v469 = vld [vmem:[#allocation2 + $0x8] sm:$0xff]
          %v470 = vld [vmem:[#allocation2 + $0x10] sm:$0xff]
          %v471 = vld [vmem:[#allocation2 + $0x18] sm:$0xff]
          %v472 = vld [vmem:[#allocation2 + $0x20] sm:$0xff]
          %v473 = vld [vmem:[#allocation2 + $0x28] sm:$0xff]
          %v474 = vld [vmem:[#allocation2 + $0x30] sm:$0xff]
          %v475 = vld [vmem:[#allocation2 + $0x38] sm:$0xff]
          %v476 = vld [vmem:[#allocation2 + $0x40] sm:$0xff]
          %v477 = vld [vmem:[#allocation2 + $0x48] sm:$0xff]
          %v478 = vld [vmem:[#allocation2 + $0x50] sm:$0xff]
          %v479 = vld [vmem:[#allocation2 + $0x58] sm:$0xff]
          %v480 = vld [vmem:[#allocation2 + $0x60] sm:$0xff]
          %v481 = vld [vmem:[#allocation2 + $0x68] sm:$0xff]
          %v482 = vld [vmem:[#allocation2 + $0x70] sm:$0xff]
          %v483 = vld [vmem:[#allocation2 + $0x78] sm:$0xff]
          %v484 = vld [vmem:[%s369] sm:$0xf]
          %v485 = vld [vmem:[%s369 + $0x4] sm:$0xf]
          %v486 = vld [vmem:[%s369 + $0x8] sm:$0xf]
          %v487 = vld [vmem:[%s369 + $0xc] sm:$0xf]
          %v488 = vld [vmem:[%s369 + $0x10] sm:$0xf]
          %v489 = vld [vmem:[%s369 + $0x14] sm:$0xf]
          %v490 = vld [vmem:[%s369 + $0x18] sm:$0xf]
          %v491 = vld [vmem:[%s369 + $0x1c] sm:$0xf]
          %v492 = vld [vmem:[%s369 + $0x20] sm:$0xf]
          %v493 = vld [vmem:[%s369 + $0x24] sm:$0xf]
          %v494 = vld [vmem:[%s369 + $0x28] sm:$0xf]
          %v495 = vld [vmem:[%s369 + $0x2c] sm:$0xf]
          %v496 = vld [vmem:[%s369 + $0x30] sm:$0xf]
          %v497 = vld [vmem:[%s369 + $0x34] sm:$0xf]
          %v498 = vld [vmem:[%s369 + $0x38] sm:$0xf]
          %v499 = vld [vmem:[%s369 + $0x3c] sm:$0xf]
          %v500 = vld [vmem:[%s426] sm:$0xf]
          %v501 = vld [vmem:[%s426 + $0x4] sm:$0xf]
          %v502 = vld [vmem:[%s426 + $0x8] sm:$0xf]
          %v503 = vld [vmem:[%s426 + $0xc] sm:$0xf]
          %v504 = vld [vmem:[%s426 + $0x10] sm:$0xf]
          %v505 = vld [vmem:[%s426 + $0x14] sm:$0xf]
          %v506 = vld [vmem:[%s426 + $0x18] sm:$0xf]
          %v507 = vld [vmem:[%s426 + $0x1c] sm:$0xf]
          %v508 = vld [vmem:[%s426 + $0x20] sm:$0xf]
          %v509 = vld [vmem:[%s426 + $0x24] sm:$0xf]
          %v510 = vld [vmem:[%s426 + $0x28] sm:$0xf]
          %v511 = vld [vmem:[%s426 + $0x2c] sm:$0xf]
          %v512 = vld [vmem:[%s426 + $0x30] sm:$0xf]
          %v513 = vld [vmem:[%s426 + $0x34] sm:$0xf]
          %v514 = vld [vmem:[%s426 + $0x38] sm:$0xf]
          %v515 = vld [vmem:[%s426 + $0x3c] sm:$0xf]
          %v532 = vunpack.c.l.b16 %v484
          %v533 = vunpack.c.l.b16 %v485
          %v534 = vunpack.c.l.b16 %v486
          %v535 = vunpack.c.l.b16 %v487
          %v536 = vunpack.c.l.b16 %v488
          %v537 = vunpack.c.l.b16 %v489
          %v538 = vunpack.c.l.b16 %v490
          %v539 = vunpack.c.l.b16 %v491
          %v540 = vunpack.c.l.b16 %v492
          %v541 = vunpack.c.l.b16 %v493
          %v542 = vunpack.c.l.b16 %v494
          %v543 = vunpack.c.l.b16 %v495
          %v544 = vunpack.c.l.b16 %v496
          %v545 = vunpack.c.l.b16 %v497
          %v546 = vunpack.c.l.b16 %v498
          %v547 = vunpack.c.l.b16 %v499
          %v548 = vpack.c.b16 %v533, %v532
          %v549 = vpack.c.b16 %v535, %v534
          %v550 = vpack.c.b16 %v537, %v536
          %v551 = vpack.c.b16 %v539, %v538
          %v552 = vpack.c.b16 %v541, %v540
          %v553 = vpack.c.b16 %v543, %v542
          %v554 = vpack.c.b16 %v545, %v544
          %v555 = vpack.c.b16 %v547, %v546
          %v580 = vunpack.c.l.b16 %v500
          %v581 = vunpack.c.l.b16 %v501
          %v582 = vunpack.c.l.b16 %v502
          %v583 = vunpack.c.l.b16 %v503
          %v584 = vunpack.c.l.b16 %v504
          %v585 = vunpack.c.l.b16 %v505
          %v586 = vunpack.c.l.b16 %v506
          %v587 = vunpack.c.l.b16 %v507
          %v588 = vunpack.c.l.b16 %v508
          %v589 = vunpack.c.l.b16 %v509
          %v590 = vunpack.c.l.b16 %v510
          %v591 = vunpack.c.l.b16 %v511
          %v592 = vunpack.c.l.b16 %v512
          %v593 = vunpack.c.l.b16 %v513
          %v594 = vunpack.c.l.b16 %v514
          %v595 = vunpack.c.l.b16 %v515
          %v596 = vpack.c.b16 %v581, %v580
          %v597 = vpack.c.b16 %v583, %v582
          %v598 = vpack.c.b16 %v585, %v584
          %v599 = vpack.c.b16 %v587, %v586
          %v600 = vpack.c.b16 %v589, %v588
          %v601 = vpack.c.b16 %v591, %v590
          %v602 = vpack.c.b16 %v593, %v592
          %v603 = vpack.c.b16 %v595, %v594
          %612 = vmatprep.subr.bf16.mxu0 0
          %613 = vmatpush1.bf16.msra.mxu0 %v603
          %614 = vmatprep.subr.bf16.mxu0 0
          %615 = vmatpush1.bf16.msra.mxu0 %v602
          %616 = vmatprep.subr.bf16.mxu0 0
          %617 = vmatpush1.bf16.msra.mxu0 %v601
          %618 = vmatprep.subr.bf16.mxu0 0
          %619 = vmatpush1.bf16.msra.mxu0 %v600
          %620 = vmatprep.subr.bf16.mxu0 0
          %621 = vmatpush1.bf16.msra.mxu0 %v599
          %622 = vmatprep.subr.bf16.mxu0 0
          %623 = vmatpush1.bf16.msra.mxu0 %v598
          %624 = vmatprep.subr.bf16.mxu0 0
          %625 = vmatpush1.bf16.msra.mxu0 %v597
          %626 = vmatprep.subr.bf16.mxu0 0
          %627 = vmatpush1.bf16.msra.mxu0 %v596
          %628 = vmatprep.subr.bf16.mxu0 0
          %629 = vmatpush2.bf16.msra.mxu0 0
          %630 = vmatprep.subr.bf16.mxu0 0
          %631 = vmatpush2.bf16.msra.mxu0 0
          %632 = vmatprep.subr.bf16.mxu0 0
          %633 = vmatpush2.bf16.msra.mxu0 0
          %634 = vmatprep.subr.bf16.mxu0 0
          %635 = vmatpush2.bf16.msra.mxu0 0
          %636 = vmatprep.subr.bf16.mxu0 0
          %637 = vmatpush2.bf16.msra.mxu0 0
          %638 = vmatprep.subr.bf16.mxu0 0
          %639 = vmatpush2.bf16.msra.mxu0 0
          %640 = vmatprep.subr.bf16.mxu0 0
          %641 = vmatpush2.bf16.msra.mxu0 0
          %642 = vmatprep.subr.bf16.mxu0 0
          %643 = vmatpush2.bf16.msra.mxu0 0
          %644 = vmatprep.mubr.bf16.mxu0 0
          %645 = vmatmul.mubr.bf16.gmra.mxu0 %v548
          %v646 = vpop.f32.mrf.mxu0
          %v647 = vadd.f32 0.0, %v646
          %v648 = vpop.f32.mrf.mxu0
          %v649 = vpop.f32.mrf.mxu0
          %v650 = vadd.f32 0.0, %v649
          %v651 = vpop.f32.mrf.mxu0
          %652 = vmatprep.mubr.bf16.mxu0 0
          %653 = vmatmul.mubr.bf16.gmra.mxu0 %v549
          %v654 = vpop.f32.mrf.mxu0
          %v655 = vadd.f32 0.0, %v654
          %v656 = vpop.f32.mrf.mxu0
          %v657 = vpop.f32.mrf.mxu0
          %v658 = vadd.f32 0.0, %v657
          %v659 = vpop.f32.mrf.mxu0
          %660 = vmatprep.mubr.bf16.mxu0 0
          %661 = vmatmul.mubr.bf16.gmra.mxu0 %v550
          %v662 = vpop.f32.mrf.mxu0
          %v663 = vadd.f32 0.0, %v662
          %v664 = vpop.f32.mrf.mxu0
          %v665 = vpop.f32.mrf.mxu0
          %v666 = vadd.f32 0.0, %v665
          %v667 = vpop.f32.mrf.mxu0
          %668 = vmatprep.mubr.bf16.mxu0 0
          %669 = vmatmul.mubr.bf16.gmra.mxu0 %v551
          %v670 = vpop.f32.mrf.mxu0
          %v671 = vadd.f32 0.0, %v670
          %v672 = vpop.f32.mrf.mxu0
          %v673 = vpop.f32.mrf.mxu0
          %v674 = vadd.f32 0.0, %v673
          %v675 = vpop.f32.mrf.mxu0
          %676 = vmatprep.mubr.bf16.mxu0 0
          %677 = vmatmul.mubr.bf16.gmra.mxu0 %v552
          %v678 = vpop.f32.mrf.mxu0
          %v679 = vadd.f32 0.0, %v678
          %v680 = vpop.f32.mrf.mxu0
          %v681 = vpop.f32.mrf.mxu0
          %v682 = vadd.f32 0.0, %v681
          %v683 = vpop.f32.mrf.mxu0
          %684 = vmatprep.mubr.bf16.mxu0 0
          %685 = vmatmul.mubr.bf16.gmra.mxu0 %v553
          %v686 = vpop.f32.mrf.mxu0
          %v687 = vadd.f32 0.0, %v686
          %v688 = vpop.f32.mrf.mxu0
          %v689 = vpop.f32.mrf.mxu0
          %v690 = vadd.f32 0.0, %v689
          %v691 = vpop.f32.mrf.mxu0
          %692 = vmatprep.mubr.bf16.mxu0 0
          %693 = vmatmul.mubr.bf16.gmra.mxu0 %v554
          %v694 = vpop.f32.mrf.mxu0
          %v695 = vadd.f32 0.0, %v694
          %v696 = vpop.f32.mrf.mxu0
          %v697 = vpop.f32.mrf.mxu0
          %v698 = vadd.f32 0.0, %v697
          %v699 = vpop.f32.mrf.mxu0
          %700 = vmatprep.mubr.bf16.mxu0 0
          %701 = vmatmul.mubr.bf16.gmra.mxu0 %v555
          %v702 = vpop.f32.mrf.mxu0
          %v703 = vadd.f32 0.0, %v702
          %v704 = vpop.f32.mrf.mxu0
          %v705 = vpop.f32.mrf.mxu0
          %v706 = vadd.f32 0.0, %v705
          %v707 = vpop.f32.mrf.mxu0
          %708 = vdwg.mxu0
          %v709 = vadd.f32 %v468, %v647
          %v710 = vadd.f32 %v469, %v650
          %v711 = vadd.f32 %v470, %v655
          %v712 = vadd.f32 %v471, %v658
          %v713 = vadd.f32 %v472, %v663
          %v714 = vadd.f32 %v473, %v666
          %v715 = vadd.f32 %v474, %v671
          %v716 = vadd.f32 %v475, %v674
          %v717 = vadd.f32 %v476, %v679
          %v718 = vadd.f32 %v477, %v682
          %v719 = vadd.f32 %v478, %v687
          %v720 = vadd.f32 %v479, %v690
          %v721 = vadd.f32 %v480, %v695
          %v722 = vadd.f32 %v481, %v698
          %v723 = vadd.f32 %v482, %v703
          %v724 = vadd.f32 %v483, %v706
          %725 = vst [vmem:[#allocation2] sm:$0xff] %v709
          %726 = vst [vmem:[#allocation2 + $0x8] sm:$0xff] %v710
          %727 = vst [vmem:[#allocation2 + $0x10] sm:$0xff] %v711
          %728 = vst [vmem:[#allocation2 + $0x18] sm:$0xff] %v712
          %729 = vst [vmem:[#allocation2 + $0x20] sm:$0xff] %v713
          %730 = vst [vmem:[#allocation2 + $0x28] sm:$0xff] %v714
          %731 = vst [vmem:[#allocation2 + $0x30] sm:$0xff] %v715
          %732 = vst [vmem:[#allocation2 + $0x38] sm:$0xff] %v716
          %733 = vst [vmem:[#allocation2 + $0x40] sm:$0xff] %v717
          %734 = vst [vmem:[#allocation2 + $0x48] sm:$0xff] %v718
          %735 = vst [vmem:[#allocation2 + $0x50] sm:$0xff] %v719
          %736 = vst [vmem:[#allocation2 + $0x58] sm:$0xff] %v720
          %737 = vst [vmem:[#allocation2 + $0x60] sm:$0xff] %v721
          %738 = vst [vmem:[#allocation2 + $0x68] sm:$0xff] %v722
          %739 = vst [vmem:[#allocation2 + $0x70] sm:$0xff] %v723
          %740 = vst [vmem:[#allocation2 + $0x78] sm:$0xff] %v724
        $region85: #{gcn_forward.4} parent=72 // pred_fallthru
          _
        %p741 = scmp.eq.s32.totalorder %s32, 3
        // Predicated region
        $region86: #{gcn_forward.4} parent=72 // pred_check
          %p742 = pneg %p741
        $region87: #{gcn_forward.4} parent=72 // pred_check_branch
          %744 = sbr.rel (%p742) target = $region89
        $region88: #{gcn_forward.4} parent=72 // pred_region
          %v745 = vld [vmem:[#allocation2] sm:$0xff]
          %v746 = vld [vmem:[#allocation2 + $0x8] sm:$0xff]
          %v747 = vld [vmem:[#allocation2 + $0x10] sm:$0xff]
          %v748 = vld [vmem:[#allocation2 + $0x18] sm:$0xff]
          %v749 = vld [vmem:[#allocation2 + $0x20] sm:$0xff]
          %v750 = vld [vmem:[#allocation2 + $0x28] sm:$0xff]
          %v751 = vld [vmem:[#allocation2 + $0x30] sm:$0xff]
          %v752 = vld [vmem:[#allocation2 + $0x38] sm:$0xff]
          %v753 = vld [vmem:[#allocation2 + $0x40] sm:$0xff]
          %v754 = vld [vmem:[#allocation2 + $0x48] sm:$0xff]
          %v755 = vld [vmem:[#allocation2 + $0x50] sm:$0xff]
          %v756 = vld [vmem:[#allocation2 + $0x58] sm:$0xff]
          %v757 = vld [vmem:[#allocation2 + $0x60] sm:$0xff]
          %v758 = vld [vmem:[#allocation2 + $0x68] sm:$0xff]
          %v759 = vld [vmem:[#allocation2 + $0x70] sm:$0xff]
          %v760 = vld [vmem:[#allocation2 + $0x78] sm:$0xff]
          %v761 = vld [vmem:[%s5] sm:$0x1]
          %v763 = vlaneseq
          %v764 = vshrl.u32 %v763, 7
          %v765 = vsub.s32 0, %v764
          %v766 = vrot.slane %v761, %v765
          %v768 = vadd.f32 %v745, %v766
          %v769 = vadd.f32 %v746, %v766
          %v770 = vadd.f32 %v747, %v766
          %v771 = vadd.f32 %v748, %v766
          %v772 = vadd.f32 %v749, %v766
          %v773 = vadd.f32 %v750, %v766
          %v774 = vadd.f32 %v751, %v766
          %v775 = vadd.f32 %v752, %v766
          %v776 = vadd.f32 %v753, %v766
          %v777 = vadd.f32 %v754, %v766
          %v778 = vadd.f32 %v755, %v766
          %v779 = vadd.f32 %v756, %v766
          %v780 = vadd.f32 %v757, %v766
          %v781 = vadd.f32 %v758, %v766
          %v782 = vadd.f32 %v759, %v766
          %v783 = vadd.f32 %v760, %v766
          %v784 = vmax.f32 %v768, 0.0
          %v785 = vmax.f32 %v769, 0.0
          %v786 = vmax.f32 %v770, 0.0
          %v787 = vmax.f32 %v771, 0.0
          %v788 = vmax.f32 %v772, 0.0
          %v789 = vmax.f32 %v773, 0.0
          %v790 = vmax.f32 %v774, 0.0
          %v791 = vmax.f32 %v775, 0.0
          %v792 = vmax.f32 %v776, 0.0
          %v793 = vmax.f32 %v777, 0.0
          %v794 = vmax.f32 %v778, 0.0
          %v795 = vmax.f32 %v779, 0.0
          %v796 = vmax.f32 %v780, 0.0
          %v797 = vmax.f32 %v781, 0.0
          %v798 = vmax.f32 %v782, 0.0
          %v799 = vmax.f32 %v783, 0.0
          %v800 = vpack.c.bf16 %v785, %v784
          %v801 = vpack.c.bf16 %v787, %v786
          %v802 = vpack.c.bf16 %v789, %v788
          %v803 = vpack.c.bf16 %v791, %v790
          %v804 = vpack.c.bf16 %v793, %v792
          %v805 = vpack.c.bf16 %v795, %v794
          %v806 = vpack.c.bf16 %v797, %v796
          %v807 = vpack.c.bf16 %v799, %v798
          %v808 = vld [vmem:[%s4] sm:$0xf]
          %v809 = vld [vmem:[%s4 + $0x4] sm:$0xf]
          %v810 = vld [vmem:[%s4 + $0x8] sm:$0xf]
          %v811 = vld [vmem:[%s4 + $0xc] sm:$0xf]
          %v812 = vld [vmem:[%s4 + $0x10] sm:$0xf]
          %v813 = vld [vmem:[%s4 + $0x14] sm:$0xf]
          %v814 = vld [vmem:[%s4 + $0x18] sm:$0xf]
          %v815 = vld [vmem:[%s4 + $0x1c] sm:$0xf]
          %v816 = vld [vmem:[%s4 + $0x20] sm:$0xf]
          %v817 = vld [vmem:[%s4 + $0x24] sm:$0xf]
          %v818 = vld [vmem:[%s4 + $0x28] sm:$0xf]
          %v819 = vld [vmem:[%s4 + $0x2c] sm:$0xf]
          %v820 = vld [vmem:[%s4 + $0x30] sm:$0xf]
          %v821 = vld [vmem:[%s4 + $0x34] sm:$0xf]
          %v822 = vld [vmem:[%s4 + $0x38] sm:$0xf]
          %v823 = vld [vmem:[%s4 + $0x3c] sm:$0xf]
          %v840 = vunpack.c.l.b16 %v808
          %v841 = vunpack.c.l.b16 %v809
          %v842 = vunpack.c.l.b16 %v810
          %v843 = vunpack.c.l.b16 %v811
          %v844 = vunpack.c.l.b16 %v812
          %v845 = vunpack.c.l.b16 %v813
          %v846 = vunpack.c.l.b16 %v814
          %v847 = vunpack.c.l.b16 %v815
          %v848 = vunpack.c.l.b16 %v816
          %v849 = vunpack.c.l.b16 %v817
          %v850 = vunpack.c.l.b16 %v818
          %v851 = vunpack.c.l.b16 %v819
          %v852 = vunpack.c.l.b16 %v820
          %v853 = vunpack.c.l.b16 %v821
          %v854 = vunpack.c.l.b16 %v822
          %v855 = vunpack.c.l.b16 %v823
          %v856 = vpack.c.b16 %v841, %v840
          %v857 = vpack.c.b16 %v843, %v842
          %v858 = vpack.c.b16 %v845, %v844
          %v859 = vpack.c.b16 %v847, %v846
          %v860 = vpack.c.b16 %v849, %v848
          %v861 = vpack.c.b16 %v851, %v850
          %v862 = vpack.c.b16 %v853, %v852
          %v863 = vpack.c.b16 %v855, %v854
          %872 = vmatprep.subr.bf16.mxu0 0
          %873 = vmatpush1.bf16.msra.mxu0 %v863
          %874 = vmatprep.subr.bf16.mxu0 0
          %875 = vmatpush1.bf16.msra.mxu0 %v862
          %876 = vmatprep.subr.bf16.mxu0 0
          %877 = vmatpush1.bf16.msra.mxu0 %v861
          %878 = vmatprep.subr.bf16.mxu0 0
          %879 = vmatpush1.bf16.msra.mxu0 %v860
          %880 = vmatprep.subr.bf16.mxu0 0
          %881 = vmatpush1.bf16.msra.mxu0 %v859
          %882 = vmatprep.subr.bf16.mxu0 0
          %883 = vmatpush1.bf16.msra.mxu0 %v858
          %884 = vmatprep.subr.bf16.mxu0 0
          %885 = vmatpush1.bf16.msra.mxu0 %v857
          %886 = vmatprep.subr.bf16.mxu0 0
          %887 = vmatpush1.bf16.msra.mxu0 %v856
          %888 = vmatprep.subr.bf16.mxu0 0
          %889 = vmatpush2.bf16.msra.mxu0 0
          %890 = vmatprep.subr.bf16.mxu0 0
          %891 = vmatpush2.bf16.msra.mxu0 0
          %892 = vmatprep.subr.bf16.mxu0 0
          %893 = vmatpush2.bf16.msra.mxu0 0
          %894 = vmatprep.subr.bf16.mxu0 0
          %895 = vmatpush2.bf16.msra.mxu0 0
          %896 = vmatprep.subr.bf16.mxu0 0
          %897 = vmatpush2.bf16.msra.mxu0 0
          %898 = vmatprep.subr.bf16.mxu0 0
          %899 = vmatpush2.bf16.msra.mxu0 0
          %900 = vmatprep.subr.bf16.mxu0 0
          %901 = vmatpush2.bf16.msra.mxu0 0
          %902 = vmatprep.subr.bf16.mxu0 0
          %903 = vmatpush2.bf16.msra.mxu0 0
          %904 = vmatprep.mubr.bf16.mxu0 0
          %905 = vmatmul.mubr.bf16.gmra.mxu0 %v800
          %v906 = vpop.f32.mrf.mxu0
          %v907 = vadd.f32 0.0, %v906
          %v908 = vpop.f32.mrf.mxu0
          %v909 = vpop.f32.mrf.mxu0
          %v910 = vadd.f32 0.0, %v909
          %v911 = vpop.f32.mrf.mxu0
          %912 = vmatprep.mubr.bf16.mxu0 0
          %913 = vmatmul.mubr.bf16.gmra.mxu0 %v801
          %v914 = vpop.f32.mrf.mxu0
          %v915 = vadd.f32 0.0, %v914
          %v916 = vpop.f32.mrf.mxu0
          %v917 = vpop.f32.mrf.mxu0
          %v918 = vadd.f32 0.0, %v917
          %v919 = vpop.f32.mrf.mxu0
          %920 = vmatprep.mubr.bf16.mxu0 0
          %921 = vmatmul.mubr.bf16.gmra.mxu0 %v802
          %v922 = vpop.f32.mrf.mxu0
          %v923 = vadd.f32 0.0, %v922
          %v924 = vpop.f32.mrf.mxu0
          %v925 = vpop.f32.mrf.mxu0
          %v926 = vadd.f32 0.0, %v925
          %v927 = vpop.f32.mrf.mxu0
          %928 = vmatprep.mubr.bf16.mxu0 0
          %929 = vmatmul.mubr.bf16.gmra.mxu0 %v803
          %v930 = vpop.f32.mrf.mxu0
          %v931 = vadd.f32 0.0, %v930
          %v932 = vpop.f32.mrf.mxu0
          %v933 = vpop.f32.mrf.mxu0
          %v934 = vadd.f32 0.0, %v933
          %v935 = vpop.f32.mrf.mxu0
          %936 = vmatprep.mubr.bf16.mxu0 0
          %937 = vmatmul.mubr.bf16.gmra.mxu0 %v804
          %v938 = vpop.f32.mrf.mxu0
          %v939 = vadd.f32 0.0, %v938
          %v940 = vpop.f32.mrf.mxu0
          %v941 = vpop.f32.mrf.mxu0
          %v942 = vadd.f32 0.0, %v941
          %v943 = vpop.f32.mrf.mxu0
          %944 = vmatprep.mubr.bf16.mxu0 0
          %945 = vmatmul.mubr.bf16.gmra.mxu0 %v805
          %v946 = vpop.f32.mrf.mxu0
          %v947 = vadd.f32 0.0, %v946
          %v948 = vpop.f32.mrf.mxu0
          %v949 = vpop.f32.mrf.mxu0
          %v950 = vadd.f32 0.0, %v949
          %v951 = vpop.f32.mrf.mxu0
          %952 = vmatprep.mubr.bf16.mxu0 0
          %953 = vmatmul.mubr.bf16.gmra.mxu0 %v806
          %v954 = vpop.f32.mrf.mxu0
          %v955 = vadd.f32 0.0, %v954
          %v956 = vpop.f32.mrf.mxu0
          %v957 = vpop.f32.mrf.mxu0
          %v958 = vadd.f32 0.0, %v957
          %v959 = vpop.f32.mrf.mxu0
          %960 = vmatprep.mubr.bf16.mxu0 0
          %961 = vmatmul.mubr.bf16.gmra.mxu0 %v807
          %v962 = vpop.f32.mrf.mxu0
          %v963 = vadd.f32 0.0, %v962
          %v964 = vpop.f32.mrf.mxu0
          %v965 = vpop.f32.mrf.mxu0
          %v966 = vadd.f32 0.0, %v965
          %v967 = vpop.f32.mrf.mxu0
          %968 = vdwg.mxu0
          %v969 = vpack.c.bf16 %v910, %v907
          %v970 = vpack.c.bf16 %v918, %v915
          %v971 = vpack.c.bf16 %v926, %v923
          %v972 = vpack.c.bf16 %v934, %v931
          %v973 = vpack.c.bf16 %v942, %v939
          %v974 = vpack.c.bf16 %v950, %v947
          %v975 = vpack.c.bf16 %v958, %v955
          %v976 = vpack.c.bf16 %v966, %v963
          %v985 = vunpack.c.l.b16 %v969
          %v986 = vunpack.c.h.b16 %v969
          %v987 = vunpack.c.l.b16 %v970
          %v988 = vunpack.c.h.b16 %v970
          %v989 = vunpack.c.l.b16 %v971
          %v990 = vunpack.c.h.b16 %v971
          %v991 = vunpack.c.l.b16 %v972
          %v992 = vunpack.c.h.b16 %v972
          %v993 = vunpack.c.l.b16 %v973
          %v994 = vunpack.c.h.b16 %v973
          %v995 = vunpack.c.l.b16 %v974
          %v996 = vunpack.c.h.b16 %v974
          %v997 = vunpack.c.l.b16 %v975
          %v998 = vunpack.c.h.b16 %v975
          %v999 = vunpack.c.l.b16 %v976
          %v1000 = vunpack.c.h.b16 %v976
          %v1001 = vpack.c.b16 %v985, %v985
          %v1002 = vpack.c.b16 %v986, %v986
          %v1003 = vpack.c.b16 %v987, %v987
          %v1004 = vpack.c.b16 %v988, %v988
          %v1005 = vpack.c.b16 %v989, %v989
          %v1006 = vpack.c.b16 %v990, %v990
          %v1007 = vpack.c.b16 %v991, %v991
          %v1008 = vpack.c.b16 %v992, %v992
          %v1009 = vpack.c.b16 %v993, %v993
          %v1010 = vpack.c.b16 %v994, %v994
          %v1011 = vpack.c.b16 %v995, %v995
          %v1012 = vpack.c.b16 %v996, %v996
          %v1013 = vpack.c.b16 %v997, %v997
          %v1014 = vpack.c.b16 %v998, %v998
          %v1015 = vpack.c.b16 %v999, %v999
          %v1016 = vpack.c.b16 %v1000, %v1000
          %1033 = vst [vmem:[%s440] sm:$0xf] %v1001
          %1034 = vst [vmem:[%s440 + $0x4] sm:$0xf] %v1002
          %1035 = vst [vmem:[%s440 + $0x8] sm:$0xf] %v1003
          %1036 = vst [vmem:[%s440 + $0xc] sm:$0xf] %v1004
          %1037 = vst [vmem:[%s440 + $0x10] sm:$0xf] %v1005
          %1038 = vst [vmem:[%s440 + $0x14] sm:$0xf] %v1006
          %1039 = vst [vmem:[%s440 + $0x18] sm:$0xf] %v1007
          %1040 = vst [vmem:[%s440 + $0x1c] sm:$0xf] %v1008
          %1041 = vst [vmem:[%s440 + $0x20] sm:$0xf] %v1009
          %1042 = vst [vmem:[%s440 + $0x24] sm:$0xf] %v1010
          %1043 = vst [vmem:[%s440 + $0x28] sm:$0xf] %v1011
          %1044 = vst [vmem:[%s440 + $0x2c] sm:$0xf] %v1012
          %1045 = vst [vmem:[%s440 + $0x30] sm:$0xf] %v1013
          %1046 = vst [vmem:[%s440 + $0x34] sm:$0xf] %v1014
          %1047 = vst [vmem:[%s440 + $0x38] sm:$0xf] %v1015
          %1048 = vst [vmem:[%s440 + $0x3c] sm:$0xf] %v1016
        $region89: #{gcn_forward.4} parent=72 // pred_fallthru
          _
        %s1049 = smul.u32 16, %s31
        %p1050 = scmp.lt.s32.totalorder %s1049, 63
        %s1051 = scalar_select %p1050, %s1049, 63
        %s1052 = smul.addr %s1051, 4
        %s1053 = scalar_lea.vmem %s6, %s1052
        // Predicated region
        $region90: #{gcn_forward.4} parent=72 // pred_check
          %p1054 = pneg %p185
        $region91: #{gcn_forward.4} parent=72 // pred_check_branch
          %1056 = sbr.rel (%p1054) target = $region93
        $region92: #{gcn_forward.4} parent=72 // pred_region
          %s1057 = smul.u32 16, %s31
        $region93: #{gcn_forward.4} parent=72 // pred_fallthru
          _
      $region73: #{gcn_forward.4} parent=5 // pred_fallthru
        _
      %p1058 = scmp.le.s32.totalorder 2, %s22
      // Predicated region
      $region94: #{gcn_forward.4} parent=5 // pred_check
        %p1059 = pneg %p1058
      $region95: #{gcn_forward.4} parent=5 // pred_check_branch
        %1061 = sbr.rel (%p1059) target = $region97
      $region96: #{gcn_forward.4} parent=5 // pred_region
        %s1062 = ssub.s32 %s22, 2
        // Predicated region
        $region98: #{gcn_forward.4} parent=96 // pred_check
          %p1063 = pneg %p191
        $region99: #{gcn_forward.4} parent=96 // pred_check_branch
          %1065 = sbr.rel (%p1063) target = $region101
        $region100: #{gcn_forward.4} parent=96 // pred_region
          %s1066 = smul.u32 16, %s33
          %p1067 = scmp.lt.s32.totalorder %s1066, 63
          %s1068 = scalar_select %p1067, %s1066, 63
          %s1069 = smul.addr %s1068, 4
          %s1070 = scalar_lea.vmem %s6, %s1069
        $region101: #{gcn_forward.4} parent=96 // pred_fallthru
          _
      $region97: #{gcn_forward.4} parent=5 // pred_fallthru
        _
    $region6: #{gcn_forward.4} parent=1 // loop_footer
      %s26 = sadd.s32 1, %s22
    $region7: #{gcn_forward.4} parent=1 // loop_footer_branch
      %21 = sbr.rel target = $region3
    $region8: #{gcn_forward.4} parent=1 // loop_exit
      _

// kernel: gcn_forward.3
$region0: #{gcn_forward.3}
  #allocation0 [shape = 'u32[]', space=smem, size = 0x4, offset = 0x4, fixed_abs, tag = 'smem constant byte address 0x4 - core index']
  #allocation1 [shape = 'u32[144,128]{1,0:T(1,128)}', space=vmem, size = 0x12000, scoped, tag = 'internal scratch']
  %s0 = inlined_call_operand.vmem [shape: bf16[512,128], index: 0, kind: input, shape index: {}]
  %s1 = inlined_call_operand.vmem [shape: bf16[128,128], index: 1, kind: input, shape index: {}]
  %s2 = inlined_call_operand.vmem [shape: bf16[512,128], index: 2, kind: output, shape index: {}]
  %s3 = sld [smem:[#allocation0]]
  $region18: #{gcn_forward.3} parent=0
    _
  %s5 = ssub.s32 1, %s3
  %s6 = scalar_select 0, %s5, %s3
  // Predicated region
  $region2: #{gcn_forward.3} parent=0 // pred_check
    _
  $region3: #{gcn_forward.3} parent=0 // pred_check_branch
    %8 = sbr.rel (0) target = $region5
  $region4: #{gcn_forward.3} parent=0 // pred_region
    _
  $region5: #{gcn_forward.3} parent=0 // pred_fallthru
    _
  // Predicated region
  $region6: #{gcn_forward.3} parent=0 // pred_check
    _
  $region7: #{gcn_forward.3} parent=0 // pred_check_branch
    %10 = sbr.rel (0) target = $region9
  $region8: #{gcn_forward.3} parent=0 // pred_region
    _
  $region9: #{gcn_forward.3} parent=0 // pred_fallthru
    _
  %v12 = vld [vmem:[%s0] sm:$0xf]
  %v13 = vld [vmem:[%s0 + $0x4] sm:$0xf]
  %v14 = vld [vmem:[%s0 + $0x8] sm:$0xf]
  %v15 = vld [vmem:[%s0 + $0xc] sm:$0xf]
  %v16 = vld [vmem:[%s0 + $0x10] sm:$0xf]
  %v17 = vld [vmem:[%s0 + $0x14] sm:$0xf]
  %v18 = vld [vmem:[%s0 + $0x18] sm:$0xf]
  %v19 = vld [vmem:[%s0 + $0x1c] sm:$0xf]
  %v20 = vld [vmem:[%s0 + $0x20] sm:$0xf]
  %v21 = vld [vmem:[%s0 + $0x24] sm:$0xf]
  %v22 = vld [vmem:[%s0 + $0x28] sm:$0xf]
  %v23 = vld [vmem:[%s0 + $0x2c] sm:$0xf]
  %v24 = vld [vmem:[%s0 + $0x30] sm:$0xf]
  %v25 = vld [vmem:[%s0 + $0x34] sm:$0xf]
  %v26 = vld [vmem:[%s0 + $0x38] sm:$0xf]
  %v27 = vld [vmem:[%s0 + $0x3c] sm:$0xf]
  %v28 = vld [vmem:[%s0 + $0x40] sm:$0xf]
  %v29 = vld [vmem:[%s0 + $0x44] sm:$0xf]
  %v30 = vld [vmem:[%s0 + $0x48] sm:$0xf]
  %v31 = vld [vmem:[%s0 + $0x4c] sm:$0xf]
  %v32 = vld [vmem:[%s0 + $0x50] sm:$0xf]
  %v33 = vld [vmem:[%s0 + $0x54] sm:$0xf]
  %v34 = vld [vmem:[%s0 + $0x58] sm:$0xf]
  %v35 = vld [vmem:[%s0 + $0x5c] sm:$0xf]
  %v36 = vld [vmem:[%s0 + $0x60] sm:$0xf]
  %v37 = vld [vmem:[%s0 + $0x64] sm:$0xf]
  %v38 = vld [vmem:[%s0 + $0x68] sm:$0xf]
  %v39 = vld [vmem:[%s0 + $0x6c] sm:$0xf]
  %v40 = vld [vmem:[%s0 + $0x70] sm:$0xf]
  %v41 = vld [vmem:[%s0 + $0x74] sm:$0xf]
  %v42 = vld [vmem:[%s0 + $0x78] sm:$0xf]
  %v43 = vld [vmem:[%s0 + $0x7c] sm:$0xf]
  %v44 = vld [vmem:[%s0 + $0x80] sm:$0xf]
  %v45 = vld [vmem:[%s0 + $0x84] sm:$0xf]
  %v46 = vld [vmem:[%s0 + $0x88] sm:$0xf]
  %v47 = vld [vmem:[%s0 + $0x8c] sm:$0xf]
  %v48 = vld [vmem:[%s0 + $0x90] sm:$0xf]
  %v49 = vld [vmem:[%s0 + $0x94] sm:$0xf]
  %v50 = vld [vmem:[%s0 + $0x98] sm:$0xf]
  %v51 = vld [vmem:[%s0 + $0x9c] sm:$0xf]
  %v52 = vld [vmem:[%s0 + $0xa0] sm:$0xf]
  %v53 = vld [vmem:[%s0 + $0xa4] sm:$0xf]
  %v54 = vld [vmem:[%s0 + $0xa8] sm:$0xf]
  %v55 = vld [vmem:[%s0 + $0xac] sm:$0xf]
  %v56 = vld [vmem:[%s0 + $0xb0] sm:$0xf]
  %v57 = vld [vmem:[%s0 + $0xb4] sm:$0xf]
  %v58 = vld [vmem:[%s0 + $0xb8] sm:$0xf]
  %v59 = vld [vmem:[%s0 + $0xbc] sm:$0xf]
  %v60 = vld [vmem:[%s0 + $0xc0] sm:$0xf]
  %v61 = vld [vmem:[%s0 + $0xc4] sm:$0xf]
  %v62 = vld [vmem:[%s0 + $0xc8] sm:$0xf]
  %v63 = vld [vmem:[%s0 + $0xcc] sm:$0xf]
  %v64 = vld [vmem:[%s0 + $0xd0] sm:$0xf]
  %v65 = vld [vmem:[%s0 + $0xd4] sm:$0xf]
  %v66 = vld [vmem:[%s0 + $0xd8] sm:$0xf]
  %v67 = vld [vmem:[%s0 + $0xdc] sm:$0xf]
  %v68 = vld [vmem:[%s0 + $0xe0] sm:$0xf]
  %v69 = vld [vmem:[%s0 + $0xe4] sm:$0xf]
  %v70 = vld [vmem:[%s0 + $0xe8] sm:$0xf]
  %v71 = vld [vmem:[%s0 + $0xec] sm:$0xf]
  %v72 = vld [vmem:[%s0 + $0xf0] sm:$0xf]
  %v73 = vld [vmem:[%s0 + $0xf4] sm:$0xf]
  %v74 = vld [vmem:[%s0 + $0xf8] sm:$0xf]
  %v75 = vld [vmem:[%s0 + $0xfc] sm:$0xf]
  %v76 = vld [vmem:[%s1] sm:$0xf]
  %v77 = vld [vmem:[%s1 + $0x4] sm:$0xf]
  %v78 = vld [vmem:[%s1 + $0x8] sm:$0xf]
  %v79 = vld [vmem:[%s1 + $0xc] sm:$0xf]
  %v80 = vld [vmem:[%s1 + $0x10] sm:$0xf]
  %v81 = vld [vmem:[%s1 + $0x14] sm:$0xf]
  %v82 = vld [vmem:[%s1 + $0x18] sm:$0xf]
  %v83 = vld [vmem:[%s1 + $0x1c] sm:$0xf]
  %v84 = vld [vmem:[%s1 + $0x20] sm:$0xf]
  %v85 = vld [vmem:[%s1 + $0x24] sm:$0xf]
  %v86 = vld [vmem:[%s1 + $0x28] sm:$0xf]
  %v87 = vld [vmem:[%s1 + $0x2c] sm:$0xf]
  %v88 = vld [vmem:[%s1 + $0x30] sm:$0xf]
  %v89 = vld [vmem:[%s1 + $0x34] sm:$0xf]
  %v90 = vld [vmem:[%s1 + $0x38] sm:$0xf]
  %v91 = vld [vmem:[%s1 + $0x3c] sm:$0xf]
  %v156 = vunpack.c.l.b16 %v12
  %v157 = vunpack.c.l.b16 %v13
  %v158 = vunpack.c.l.b16 %v14
  %v159 = vunpack.c.l.b16 %v15
  %v160 = vunpack.c.l.b16 %v16
  %v161 = vunpack.c.l.b16 %v17
  %v162 = vunpack.c.l.b16 %v18
  %v163 = vunpack.c.l.b16 %v19
  %v164 = vunpack.c.l.b16 %v20
  %v165 = vunpack.c.l.b16 %v21
  %v166 = vunpack.c.l.b16 %v22
  %v167 = vunpack.c.l.b16 %v23
  %v168 = vunpack.c.l.b16 %v24
  %v169 = vunpack.c.l.b16 %v25
  %v170 = vunpack.c.l.b16 %v26
  %v171 = vunpack.c.l.b16 %v27
  %v172 = vunpack.c.l.b16 %v28
  %v173 = vunpack.c.l.b16 %v29
  %v174 = vunpack.c.l.b16 %v30
  %v175 = vunpack.c.l.b16 %v31
  %v176 = vunpack.c.l.b16 %v32
  %v177 = vunpack.c.l.b16 %v33
  %v178 = vunpack.c.l.b16 %v34
  %v179 = vunpack.c.l.b16 %v35
  %v180 = vunpack.c.l.b16 %v36
  %v181 = vunpack.c.l.b16 %v37
  %v182 = vunpack.c.l.b16 %v38
  %v183 = vunpack.c.l.b16 %v39
  %v184 = vunpack.c.l.b16 %v40
  %v185 = vunpack.c.l.b16 %v41
  %v186 = vunpack.c.l.b16 %v42
  %v187 = vunpack.c.l.b16 %v43
  %v188 = vunpack.c.l.b16 %v44
  %v189 = vunpack.c.l.b16 %v45
  %v190 = vunpack.c.l.b16 %v46
  %v191 = vunpack.c.l.b16 %v47
  %v192 = vunpack.c.l.b16 %v48
  %v193 = vunpack.c.l.b16 %v49
  %v194 = vunpack.c.l.b16 %v50
  %v195 = vunpack.c.l.b16 %v51
  %v196 = vunpack.c.l.b16 %v52
  %v197 = vunpack.c.l.b16 %v53
  %v198 = vunpack.c.l.b16 %v54
  %v199 = vunpack.c.l.b16 %v55
  %v200 = vunpack.c.l.b16 %v56
  %v201 = vunpack.c.l.b16 %v57
  %v202 = vunpack.c.l.b16 %v58
  %v203 = vunpack.c.l.b16 %v59
  %v204 = vunpack.c.l.b16 %v60
  %v205 = vunpack.c.l.b16 %v61
  %v206 = vunpack.c.l.b16 %v62
  %v207 = vunpack.c.l.b16 %v63
  %v208 = vunpack.c.l.b16 %v64
  %v209 = vunpack.c.l.b16 %v65
  %v210 = vunpack.c.l.b16 %v66
  %v211 = vunpack.c.l.b16 %v67
  %v212 = vunpack.c.l.b16 %v68
  %v213 = vunpack.c.l.b16 %v69
  %v214 = vunpack.c.l.b16 %v70
  %v215 = vunpack.c.l.b16 %v71
  %v216 = vunpack.c.l.b16 %v72
  %v217 = vunpack.c.l.b16 %v73
  %v218 = vunpack.c.l.b16 %v74
  %v219 = vunpack.c.l.b16 %v75
  %v220 = vpack.c.b16 %v157, %v156
  %v221 = vpack.c.b16 %v159, %v158
  %v222 = vpack.c.b16 %v161, %v160
  %v223 = vpack.c.b16 %v163, %v162
  %v224 = vpack.c.b16 %v165, %v164
  %v225 = vpack.c.b16 %v167, %v166
  %v226 = vpack.c.b16 %v169, %v168
  %v227 = vpack.c.b16 %v171, %v170
  %v228 = vpack.c.b16 %v173, %v172
  %v229 = vpack.c.b16 %v175, %v174
  %v230 = vpack.c.b16 %v177, %v176
  %v231 = vpack.c.b16 %v179, %v178
  %v232 = vpack.c.b16 %v181, %v180
  %v233 = vpack.c.b16 %v183, %v182
  %v234 = vpack.c.b16 %v185, %v184
  %v235 = vpack.c.b16 %v187, %v186
  %v236 = vpack.c.b16 %v189, %v188
  %v237 = vpack.c.b16 %v191, %v190
  %v238 = vpack.c.b16 %v193, %v192
  %v239 = vpack.c.b16 %v195, %v194
  %v240 = vpack.c.b16 %v197, %v196
  %v241 = vpack.c.b16 %v199, %v198
  %v242 = vpack.c.b16 %v201, %v200
  %v243 = vpack.c.b16 %v203, %v202
  %v244 = vpack.c.b16 %v205, %v204
  %v245 = vpack.c.b16 %v207, %v206
  %v246 = vpack.c.b16 %v209, %v208
  %v247 = vpack.c.b16 %v211, %v210
  %v248 = vpack.c.b16 %v213, %v212
  %v249 = vpack.c.b16 %v215, %v214
  %v250 = vpack.c.b16 %v217, %v216
  %v251 = vpack.c.b16 %v219, %v218
  %v300 = vunpack.c.l.b16 %v76
  %v301 = vunpack.c.l.b16 %v77
  %v302 = vunpack.c.l.b16 %v78
  %v303 = vunpack.c.l.b16 %v79
  %v304 = vunpack.c.l.b16 %v80
  %v305 = vunpack.c.l.b16 %v81
  %v306 = vunpack.c.l.b16 %v82
  %v307 = vunpack.c.l.b16 %v83
  %v308 = vunpack.c.l.b16 %v84
  %v309 = vunpack.c.l.b16 %v85
  %v310 = vunpack.c.l.b16 %v86
  %v311 = vunpack.c.l.b16 %v87
  %v312 = vunpack.c.l.b16 %v88
  %v313 = vunpack.c.l.b16 %v89
  %v314 = vunpack.c.l.b16 %v90
  %v315 = vunpack.c.l.b16 %v91
  %v316 = vpack.c.b16 %v301, %v300
  %v317 = vpack.c.b16 %v303, %v302
  %v318 = vpack.c.b16 %v305, %v304
  %v319 = vpack.c.b16 %v307, %v306
  %v320 = vpack.c.b16 %v309, %v308
  %v321 = vpack.c.b16 %v311, %v310
  %v322 = vpack.c.b16 %v313, %v312
  %v323 = vpack.c.b16 %v315, %v314
  %332 = vmatprep.subr.bf16.mxu0 0
  %333 = vmatpush1.bf16.msra.mxu0 %v323
  %334 = vmatprep.subr.bf16.mxu0 0
  %335 = vmatpush1.bf16.msra.mxu0 %v322
  %336 = vmatprep.subr.bf16.mxu0 0
  %337 = vmatpush1.bf16.msra.mxu0 %v321
  %338 = vmatprep.subr.bf16.mxu0 0
  %339 = vmatpush1.bf16.msra.mxu0 %v320
  %340 = vmatprep.subr.bf16.mxu0 0
  %341 = vmatpush1.bf16.msra.mxu0 %v319
  %342 = vmatprep.subr.bf16.mxu0 0
  %343 = vmatpush1.bf16.msra.mxu0 %v318
  %344 = vmatprep.subr.bf16.mxu0 0
  %345 = vmatpush1.bf16.msra.mxu0 %v317
  %346 = vmatprep.subr.bf16.mxu0 0
  %347 = vmatpush1.bf16.msra.mxu0 %v316
  %348 = vmatprep.subr.bf16.mxu0 0
  %349 = vmatpush2.bf16.msra.mxu0 0
  %350 = vmatprep.subr.bf16.mxu0 0
  %351 = vmatpush2.bf16.msra.mxu0 0
  %352 = vmatprep.subr.bf16.mxu0 0
  %353 = vmatpush2.bf16.msra.mxu0 0
  %354 = vmatprep.subr.bf16.mxu0 0
  %355 = vmatpush2.bf16.msra.mxu0 0
  %356 = vmatprep.subr.bf16.mxu0 0
  %357 = vmatpush2.bf16.msra.mxu0 0
  %358 = vmatprep.subr.bf16.mxu0 0
  %359 = vmatpush2.bf16.msra.mxu0 0
  %360 = vmatprep.subr.bf16.mxu0 0
  %361 = vmatpush2.bf16.msra.mxu0 0
  %362 = vmatprep.subr.bf16.mxu0 0
  %363 = vmatpush2.bf16.msra.mxu0 0
  %364 = vmatprep.mubr.bf16.mxu0 0
  %365 = vmatmul.mubr.bf16.gmra.mxu0 %v220
  %v366 = vpop.f32.mrf.mxu0
  %v367 = vadd.f32 0.0, %v366
  %v368 = vpop.f32.mrf.mxu0
  %v369 = vpop.f32.mrf.mxu0
  %v370 = vadd.f32 0.0, %v369
  %v371 = vpop.f32.mrf.mxu0
  %372 = vmatprep.mubr.bf16.mxu0 0
  %373 = vmatmul.mubr.bf16.gmra.mxu0 %v221
  %v374 = vpop.f32.mrf.mxu0
  %v375 = vadd.f32 0.0, %v374
  %v376 = vpop.f32.mrf.mxu0
  %v377 = vpop.f32.mrf.mxu0
  %v378 = vadd.f32 0.0, %v377
  %v379 = vpop.f32.mrf.mxu0
  %380 = vmatprep.mubr.bf16.mxu0 0
  %381 = vmatmul.mubr.bf16.gmra.mxu0 %v222
  %v382 = vpop.f32.mrf.mxu0
  %v383 = vadd.f32 0.0, %v382
  %v384 = vpop.f32.mrf.mxu0
  %v385 = vpop.f32.mrf.mxu0
  %v386 = vadd.f32 0.0, %v385
  %v387 = vpop.f32.mrf.mxu0
  %388 = vmatprep.mubr.bf16.mxu0 0
  %389 = vmatmul.mubr.bf16.gmra.mxu0 %v223
  %v390 = vpop.f32.mrf.mxu0
  %v391 = vadd.f32 0.0, %v390
  %v392 = vpop.f32.mrf.mxu0
  %v393 = vpop.f32.mrf.mxu0
  %v394 = vadd.f32 0.0, %v393
  %v395 = vpop.f32.mrf.mxu0
  %396 = vmatprep.mubr.bf16.mxu0 0
  %397 = vmatmul.mubr.bf16.gmra.mxu0 %v224
  %v398 = vpop.f32.mrf.mxu0
  %v399 = vadd.f32 0.0, %v398
  %v400 = vpop.f32.mrf.mxu0
  %v401 = vpop.f32.mrf.mxu0
  %v402 = vadd.f32 0.0, %v401
  %v403 = vpop.f32.mrf.mxu0
  %404 = vmatprep.mubr.bf16.mxu0 0
  %405 = vmatmul.mubr.bf16.gmra.mxu0 %v225
  %v406 = vpop.f32.mrf.mxu0
  %v407 = vadd.f32 0.0, %v406
  %v408 = vpop.f32.mrf.mxu0
  %v409 = vpop.f32.mrf.mxu0
  %v410 = vadd.f32 0.0, %v409
  %v411 = vpop.f32.mrf.mxu0
  %412 = vmatprep.mubr.bf16.mxu0 0
  %413 = vmatmul.mubr.bf16.gmra.mxu0 %v226
  %v414 = vpop.f32.mrf.mxu0
  %v415 = vadd.f32 0.0, %v414
  %v416 = vpop.f32.mrf.mxu0
  %v417 = vpop.f32.mrf.mxu0
  %v418 = vadd.f32 0.0, %v417
  %v419 = vpop.f32.mrf.mxu0
  %420 = vmatprep.mubr.bf16.mxu0 0
  %421 = vmatmul.mubr.bf16.gmra.mxu0 %v227
  %v422 = vpop.f32.mrf.mxu0
  %v423 = vadd.f32 0.0, %v422
  %v424 = vpop.f32.mrf.mxu0
  %v425 = vpop.f32.mrf.mxu0
  %v426 = vadd.f32 0.0, %v425
  %v427 = vpop.f32.mrf.mxu0
  %428 = vmatprep.mubr.bf16.mxu0 0
  %429 = vmatmul.mubr.bf16.gmra.mxu0 %v228
  %v430 = vpop.f32.mrf.mxu0
  %v431 = vadd.f32 0.0, %v430
  %v432 = vpop.f32.mrf.mxu0
  %v433 = vpop.f32.mrf.mxu0
  %v434 = vadd.f32 0.0, %v433
  %v435 = vpop.f32.mrf.mxu0
  %436 = vmatprep.mubr.bf16.mxu0 0
  %437 = vmatmul.mubr.bf16.gmra.mxu0 %v229
  %v438 = vpop.f32.mrf.mxu0
  %v439 = vadd.f32 0.0, %v438
  %v440 = vpop.f32.mrf.mxu0
  %v441 = vpop.f32.mrf.mxu0
  %v442 = vadd.f32 0.0, %v441
  %v443 = vpop.f32.mrf.mxu0
  %444 = vmatprep.mubr.bf16.mxu0 0
  %445 = vmatmul.mubr.bf16.gmra.mxu0 %v230
  %v446 = vpop.f32.mrf.mxu0
  %v447 = vadd.f32 0.0, %v446
  %v448 = vpop.f32.mrf.mxu0
  %v449 = vpop.f32.mrf.mxu0
  %v450 = vadd.f32 0.0, %v449
  %v451 = vpop.f32.mrf.mxu0
  %452 = vmatprep.mubr.bf16.mxu0 0
  %453 = vmatmul.mubr.bf16.gmra.mxu0 %v231
  %v454 = vpop.f32.mrf.mxu0
  %v455 = vadd.f32 0.0, %v454
  %v456 = vpop.f32.mrf.mxu0
  %v457 = vpop.f32.mrf.mxu0
  %v458 = vadd.f32 0.0, %v457
  %v459 = vpop.f32.mrf.mxu0
  %460 = vmatprep.mubr.bf16.mxu0 0
  %461 = vmatmul.mubr.bf16.gmra.mxu0 %v232
  %v462 = vpop.f32.mrf.mxu0
  %v463 = vadd.f32 0.0, %v462
  %v464 = vpop.f32.mrf.mxu0
  %v465 = vpop.f32.mrf.mxu0
  %v466 = vadd.f32 0.0, %v465
  %v467 = vpop.f32.mrf.mxu0
  %468 = vmatprep.mubr.bf16.mxu0 0
  %469 = vmatmul.mubr.bf16.gmra.mxu0 %v233
  %v470 = vpop.f32.mrf.mxu0
  %v471 = vadd.f32 0.0, %v470
  %v472 = vpop.f32.mrf.mxu0
  %v473 = vpop.f32.mrf.mxu0
  %v474 = vadd.f32 0.0, %v473
  %v475 = vpop.f32.mrf.mxu0
  %476 = vmatprep.mubr.bf16.mxu0 0
  %477 = vmatmul.mubr.bf16.gmra.mxu0 %v234
  %v478 = vpop.f32.mrf.mxu0
  %v479 = vadd.f32 0.0, %v478
  %v480 = vpop.f32.mrf.mxu0
  %v481 = vpop.f32.mrf.mxu0
  %v482 = vadd.f32 0.0, %v481
  %v483 = vpop.f32.mrf.mxu0
  %484 = vmatprep.mubr.bf16.mxu0 0
  %485 = vmatmul.mubr.bf16.gmra.mxu0 %v235
  %v486 = vpop.f32.mrf.mxu0
  %v487 = vadd.f32 0.0, %v486
  %v488 = vpop.f32.mrf.mxu0
  %v489 = vpop.f32.mrf.mxu0
  %v490 = vadd.f32 0.0, %v489
  %v491 = vpop.f32.mrf.mxu0
  %492 = vmatprep.mubr.bf16.mxu0 0
  %493 = vmatmul.mubr.bf16.gmra.mxu0 %v236
  %v494 = vpop.f32.mrf.mxu0
  %v495 = vadd.f32 0.0, %v494
  %v496 = vpop.f32.mrf.mxu0
  %v497 = vpop.f32.mrf.mxu0
  %v498 = vadd.f32 0.0, %v497
  %v499 = vpop.f32.mrf.mxu0
  %500 = vmatprep.mubr.bf16.mxu0 0
  %501 = vmatmul.mubr.bf16.gmra.mxu0 %v237
  %v502 = vpop.f32.mrf.mxu0
  %v503 = vadd.f32 0.0, %v502
  %v504 = vpop.f32.mrf.mxu0
  %v505 = vpop.f32.mrf.mxu0
  %v506 = vadd.f32 0.0, %v505
  %v507 = vpop.f32.mrf.mxu0
  %508 = vmatprep.mubr.bf16.mxu0 0
  %509 = vmatmul.mubr.bf16.gmra.mxu0 %v238
  %v510 = vpop.f32.mrf.mxu0
  %v511 = vadd.f32 0.0, %v510
  %v512 = vpop.f32.mrf.mxu0
  %v513 = vpop.f32.mrf.mxu0
  %v514 = vadd.f32 0.0, %v513
  %v515 = vpop.f32.mrf.mxu0
  %516 = vmatprep.mubr.bf16.mxu0 0
  %517 = vmatmul.mubr.bf16.gmra.mxu0 %v239
  %v518 = vpop.f32.mrf.mxu0
  %v519 = vadd.f32 0.0, %v518
  %v520 = vpop.f32.mrf.mxu0
  %v521 = vpop.f32.mrf.mxu0
  %v522 = vadd.f32 0.0, %v521
  %v523 = vpop.f32.mrf.mxu0
  %524 = vmatprep.mubr.bf16.mxu0 0
  %525 = vmatmul.mubr.bf16.gmra.mxu0 %v240
  %v526 = vpop.f32.mrf.mxu0
  %v527 = vadd.f32 0.0, %v526
  %v528 = vpop.f32.mrf.mxu0
  %v529 = vpop.f32.mrf.mxu0
  %v530 = vadd.f32 0.0, %v529
  %v531 = vpop.f32.mrf.mxu0
  %532 = vmatprep.mubr.bf16.mxu0 0
  %533 = vmatmul.mubr.bf16.gmra.mxu0 %v241
  %v534 = vpop.f32.mrf.mxu0
  %v535 = vadd.f32 0.0, %v534
  %v536 = vpop.f32.mrf.mxu0
  %v537 = vpop.f32.mrf.mxu0
  %v538 = vadd.f32 0.0, %v537
  %v539 = vpop.f32.mrf.mxu0
  %540 = vmatprep.mubr.bf16.mxu0 0
  %541 = vmatmul.mubr.bf16.gmra.mxu0 %v242
  %v542 = vpop.f32.mrf.mxu0
  %v543 = vadd.f32 0.0, %v542
  %v544 = vpop.f32.mrf.mxu0
  %v545 = vpop.f32.mrf.mxu0
  %v546 = vadd.f32 0.0, %v545
  %v547 = vpop.f32.mrf.mxu0
  %548 = vmatprep.mubr.bf16.mxu0 0
  %549 = vmatmul.mubr.bf16.gmra.mxu0 %v243
  %v550 = vpop.f32.mrf.mxu0
  %v551 = vadd.f32 0.0, %v550
  %v552 = vpop.f32.mrf.mxu0
  %v553 = vpop.f32.mrf.mxu0
  %v554 = vadd.f32 0.0, %v553
  %v555 = vpop.f32.mrf.mxu0
  %556 = vmatprep.mubr.bf16.mxu0 0
  %557 = vmatmul.mubr.bf16.gmra.mxu0 %v244
  %v558 = vpop.f32.mrf.mxu0
  %v559 = vadd.f32 0.0, %v558
  %v560 = vpop.f32.mrf.mxu0
  %v561 = vpop.f32.mrf.mxu0
  %v562 = vadd.f32 0.0, %v561
  %v563 = vpop.f32.mrf.mxu0
  %564 = vmatprep.mubr.bf16.mxu0 0
  %565 = vmatmul.mubr.bf16.gmra.mxu0 %v245
  %v566 = vpop.f32.mrf.mxu0
  %v567 = vadd.f32 0.0, %v566
  %v568 = vpop.f32.mrf.mxu0
  %v569 = vpop.f32.mrf.mxu0
  %v570 = vadd.f32 0.0, %v569
  %v571 = vpop.f32.mrf.mxu0
  %572 = vmatprep.mubr.bf16.mxu0 0
  %573 = vmatmul.mubr.bf16.gmra.mxu0 %v246
  %v574 = vpop.f32.mrf.mxu0
  %v575 = vadd.f32 0.0, %v574
  %v576 = vpop.f32.mrf.mxu0
  %v577 = vpop.f32.mrf.mxu0
  %v578 = vadd.f32 0.0, %v577
  %v579 = vpop.f32.mrf.mxu0
  %580 = vmatprep.mubr.bf16.mxu0 0
  %581 = vmatmul.mubr.bf16.gmra.mxu0 %v247
  %v582 = vpop.f32.mrf.mxu0
  %v583 = vadd.f32 0.0, %v582
  %v584 = vpop.f32.mrf.mxu0
  %v585 = vpop.f32.mrf.mxu0
  %v586 = vadd.f32 0.0, %v585
  %v587 = vpop.f32.mrf.mxu0
  %588 = vmatprep.mubr.bf16.mxu0 0
  %589 = vmatmul.mubr.bf16.gmra.mxu0 %v248
  %v590 = vpop.f32.mrf.mxu0
  %v591 = vadd.f32 0.0, %v590
  %v592 = vpop.f32.mrf.mxu0
  %v593 = vpop.f32.mrf.mxu0
  %v594 = vadd.f32 0.0, %v593
  %v595 = vpop.f32.mrf.mxu0
  %596 = vmatprep.mubr.bf16.mxu0 0
  %597 = vmatmul.mubr.bf16.gmra.mxu0 %v249
  %v598 = vpop.f32.mrf.mxu0
  %v599 = vadd.f32 0.0, %v598
  %v600 = vpop.f32.mrf.mxu0
  %v601 = vpop.f32.mrf.mxu0
  %v602 = vadd.f32 0.0, %v601
  %v603 = vpop.f32.mrf.mxu0
  %604 = vmatprep.mubr.bf16.mxu0 0
  %605 = vmatmul.mubr.bf16.gmra.mxu0 %v250
  %v606 = vpop.f32.mrf.mxu0
  %v607 = vadd.f32 0.0, %v606
  %v608 = vpop.f32.mrf.mxu0
  %v609 = vpop.f32.mrf.mxu0
  %v610 = vadd.f32 0.0, %v609
  %v611 = vpop.f32.mrf.mxu0
  %612 = vmatprep.mubr.bf16.mxu0 0
  %613 = vmatmul.mubr.bf16.gmra.mxu0 %v251
  %v614 = vpop.f32.mrf.mxu0
  %v615 = vadd.f32 0.0, %v614
  %v616 = vpop.f32.mrf.mxu0
  %v617 = vpop.f32.mrf.mxu0
  %v618 = vadd.f32 0.0, %v617
  %v619 = vpop.f32.mrf.mxu0
  %620 = vdwg.mxu0
  %v621 = vpack.c.bf16 %v370, %v367
  %v622 = vpack.c.bf16 %v378, %v375
  %v623 = vpack.c.bf16 %v386, %v383
  %v624 = vpack.c.bf16 %v394, %v391
  %v625 = vpack.c.bf16 %v402, %v399
  %v626 = vpack.c.bf16 %v410, %v407
  %v627 = vpack.c.bf16 %v418, %v415
  %v628 = vpack.c.bf16 %v426, %v423
  %v629 = vpack.c.bf16 %v434, %v431
  %v630 = vpack.c.bf16 %v442, %v439
  %v631 = vpack.c.bf16 %v450, %v447
  %v632 = vpack.c.bf16 %v458, %v455
  %v633 = vpack.c.bf16 %v466, %v463
  %v634 = vpack.c.bf16 %v474, %v471
  %v635 = vpack.c.bf16 %v482, %v479
  %v636 = vpack.c.bf16 %v490, %v487
  %v637 = vpack.c.bf16 %v498, %v495
  %v638 = vpack.c.bf16 %v506, %v503
  %v639 = vpack.c.bf16 %v514, %v511
  %v640 = vpack.c.bf16 %v522, %v519
  %v641 = vpack.c.bf16 %v530, %v527
  %v642 = vpack.c.bf16 %v538, %v535
  %v643 = vpack.c.bf16 %v546, %v543
  %v644 = vpack.c.bf16 %v554, %v551
  %v645 = vpack.c.bf16 %v562, %v559
  %v646 = vpack.c.bf16 %v570, %v567
  %v647 = vpack.c.bf16 %v578, %v575
  %v648 = vpack.c.bf16 %v586, %v583
  %v649 = vpack.c.bf16 %v594, %v591
  %v650 = vpack.c.bf16 %v602, %v599
  %v651 = vpack.c.bf16 %v610, %v607
  %v652 = vpack.c.bf16 %v618, %v615
  %v685 = vunpack.c.l.b16 %v621
  %v686 = vunpack.c.h.b16 %v621
  %v687 = vunpack.c.l.b16 %v622
  %v688 = vunpack.c.h.b16 %v622
  %v689 = vunpack.c.l.b16 %v623
  %v690 = vunpack.c.h.b16 %v623
  %v691 = vunpack.c.l.b16 %v624
  %v692 = vunpack.c.h.b16 %v624
  %v693 = vunpack.c.l.b16 %v625
  %v694 = vunpack.c.h.b16 %v625
  %v695 = vunpack.c.l.b16 %v626
  %v696 = vunpack.c.h.b16 %v626
  %v697 = vunpack.c.l.b16 %v627
  %v698 = vunpack.c.h.b16 %v627
  %v699 = vunpack.c.l.b16 %v628
  %v700 = vunpack.c.h.b16 %v628
  %v701 = vunpack.c.l.b16 %v629
  %v702 = vunpack.c.h.b16 %v629
  %v703 = vunpack.c.l.b16 %v630
  %v704 = vunpack.c.h.b16 %v630
  %v705 = vunpack.c.l.b16 %v631
  %v706 = vunpack.c.h.b16 %v631
  %v707 = vunpack.c.l.b16 %v632
  %v708 = vunpack.c.h.b16 %v632
  %v709 = vunpack.c.l.b16 %v633
  %v710 = vunpack.c.h.b16 %v633
  %v711 = vunpack.c.l.b16 %v634
  %v712 = vunpack.c.h.b16 %v634
  %v713 = vunpack.c.l.b16 %v635
  %v714 = vunpack.c.h.b16 %v635
  %v715 = vunpack.c.l.b16 %v636
  %v716 = vunpack.c.h.b16 %v636
  %v717 = vunpack.c.l.b16 %v637
  %v718 = vunpack.c.h.b16 %v637
  %v719 = vunpack.c.l.b16 %v638
  %v720 = vunpack.c.h.b16 %v638
  %v721 = vunpack.c.l.b16 %v639
  %v722 = vunpack.c.h.b16 %v639
  %v723 = vunpack.c.l.b16 %v640
  %v724 = vunpack.c.h.b16 %v640
  %v725 = vunpack.c.l.b16 %v641
  %v726 = vunpack.c.h.b16 %v641
  %v727 = vunpack.c.l.b16 %v642
  %v728 = vunpack.c.h.b16 %v642
  %v729 = vunpack.c.l.b16 %v643
  %v730 = vunpack.c.h.b16 %v643
  %v731 = vunpack.c.l.b16 %v644
  %v732 = vunpack.c.h.b16 %v644
  %v733 = vunpack.c.l.b16 %v645
  %v734 = vunpack.c.h.b16 %v645
  %v735 = vunpack.c.l.b16 %v646
  %v736 = vunpack.c.h.b16 %v646
  %v737 = vunpack.c.l.b16 %v647
  %v738 = vunpack.c.h.b16 %v647
  %v739 = vunpack.c.l.b16 %v648
  %v740 = vunpack.c.h.b16 %v648
  %v741 = vunpack.c.l.b16 %v649
  %v742 = vunpack.c.h.b16 %v649
  %v743 = vunpack.c.l.b16 %v650
  %v744 = vunpack.c.h.b16 %v650
  %v745 = vunpack.c.l.b16 %v651
  %v746 = vunpack.c.h.b16 %v651
  %v747 = vunpack.c.l.b16 %v652
  %v748 = vunpack.c.h.b16 %v652
  %v749 = vpack.c.b16 %v685, %v685
  %v750 = vpack.c.b16 %v686, %v686
  %v751 = vpack.c.b16 %v687, %v687
  %v752 = vpack.c.b16 %v688, %v688
  %v753 = vpack.c.b16 %v689, %v689
  %v754 = vpack.c.b16 %v690, %v690
  %v755 = vpack.c.b16 %v691, %v691
  %v756 = vpack.c.b16 %v692, %v692
  %v757 = vpack.c.b16 %v693, %v693
  %v758 = vpack.c.b16 %v694, %v694
  %v759 = vpack.c.b16 %v695, %v695
  %v760 = vpack.c.b16 %v696, %v696
  %v761 = vpack.c.b16 %v697, %v697
  %v762 = vpack.c.b16 %v698, %v698
  %v763 = vpack.c.b16 %v699, %v699
  %v764 = vpack.c.b16 %v700, %v700
  %v765 = vpack.c.b16 %v701, %v701
  %v766 = vpack.c.b16 %v702, %v702
  %v767 = vpack.c.b16 %v703, %v703
  %v768 = vpack.c.b16 %v704, %v704
  %v769 = vpack.c.b16 %v705, %v705
  %v770 = vpack.c.b16 %v706, %v706
  %v771 = vpack.c.b16 %v707, %v707
  %v772 = vpack.c.b16 %v708, %v708
  %v773 = vpack.c.b16 %v709, %v709
  %v774 = vpack.c.b16 %v710, %v710
  %v775 = vpack.c.b16 %v711, %v711
  %v776 = vpack.c.b16 %v712, %v712
  %v777 = vpack.c.b16 %v713, %v713
  %v778 = vpack.c.b16 %v714, %v714
  %v779 = vpack.c.b16 %v715, %v715
  %v780 = vpack.c.b16 %v716, %v716
  %v781 = vpack.c.b16 %v717, %v717
  %v782 = vpack.c.b16 %v718, %v718
  %v783 = vpack.c.b16 %v719, %v719
  %v784 = vpack.c.b16 %v720, %v720
  %v785 = vpack.c.b16 %v721, %v721
  %v786 = vpack.c.b16 %v722, %v722
  %v787 = vpack.c.b16 %v723, %v723
  %v788 = vpack.c.b16 %v724, %v724
  %v789 = vpack.c.b16 %v725, %v725
  %v790 = vpack.c.b16 %v726, %v726
  %v791 = vpack.c.b16 %v727, %v727
  %v792 = vpack.c.b16 %v728, %v728
  %v793 = vpack.c.b16 %v729, %v729
  %v794 = vpack.c.b16 %v730, %v730
  %v795 = vpack.c.b16 %v731, %v731
  %v796 = vpack.c.b16 %v732, %v732
  %v797 = vpack.c.b16 %v733, %v733
  %v798 = vpack.c.b16 %v734, %v734
  %v799 = vpack.c.b16 %v735, %v735
  %v800 = vpack.c.b16 %v736, %v736
  %v801 = vpack.c.b16 %v737, %v737
  %v802 = vpack.c.b16 %v738, %v738
  %v803 = vpack.c.b16 %v739, %v739
  %v804 = vpack.c.b16 %v740, %v740
  %v805 = vpack.c.b16 %v741, %v741
  %v806 = vpack.c.b16 %v742, %v742
  %v807 = vpack.c.b16 %v743, %v743
  %v808 = vpack.c.b16 %v744, %v744
  %v809 = vpack.c.b16 %v745, %v745
  %v810 = vpack.c.b16 %v746, %v746
  %v811 = vpack.c.b16 %v747, %v747
  %v812 = vpack.c.b16 %v748, %v748
  %877 = vst [vmem:[%s2] sm:$0xf] %v749
  %878 = vst [vmem:[%s2 + $0x4] sm:$0xf] %v750
  %879 = vst [vmem:[%s2 + $0x8] sm:$0xf] %v751
  %880 = vst [vmem:[%s2 + $0xc] sm:$0xf] %v752
  %881 = vst [vmem:[%s2 + $0x10] sm:$0xf] %v753
  %882 = vst [vmem:[%s2 + $0x14] sm:$0xf] %v754
  %883 = vst [vmem:[%s2 + $0x18] sm:$0xf] %v755
  %884 = vst [vmem:[%s2 + $0x1c] sm:$0xf] %v756
  %885 = vst [vmem:[%s2 + $0x20] sm:$0xf] %v757
  %886 = vst [vmem:[%s2 + $0x24] sm:$0xf] %v758
  %887 = vst [vmem:[%s2 + $0x28] sm:$0xf] %v759
  %888 = vst [vmem:[%s2 + $0x2c] sm:$0xf] %v760
  %889 = vst [vmem:[%s2 + $0x30] sm:$0xf] %v761
  %890 = vst [vmem:[%s2 + $0x34] sm:$0xf] %v762
  %891 = vst [vmem:[%s2 + $0x38] sm:$0xf] %v763
  %892 = vst [vmem:[%s2 + $0x3c] sm:$0xf] %v764
  %893 = vst [vmem:[%s2 + $0x40] sm:$0xf] %v765
  %894 = vst [vmem:[%s2 + $0x44] sm:$0xf] %v766
  %895 = vst [vmem:[%s2 + $0x48] sm:$0xf] %v767
  %896 = vst [vmem:[%s2 + $0x4c] sm:$0xf] %v768
  %897 = vst [vmem:[%s2 + $0x50] sm:$0xf] %v769
  %898 = vst [vmem:[%s2 + $0x54] sm:$0xf] %v770
  %899 = vst [vmem:[%s2 + $0x58] sm:$0xf] %v771
  %900 = vst [vmem:[%s2 + $0x5c] sm:$0xf] %v772
  %901 = vst [vmem:[%s2 + $0x60] sm:$0xf] %v773
  %902 = vst [vmem:[%s2 + $0x64] sm:$0xf] %v774
  %903 = vst [vmem:[%s2 + $0x68] sm:$0xf] %v775
  %904 = vst [vmem:[%s2 + $0x6c] sm:$0xf] %v776
  %905 = vst [vmem:[%s2 + $0x70] sm:$0xf] %v777
  %906 = vst [vmem:[%s2 + $0x74] sm:$0xf] %v778
  %907 = vst [vmem:[%s2 + $0x78] sm:$0xf] %v779
  %908 = vst [vmem:[%s2 + $0x7c] sm:$0xf] %v780
  %909 = vst [vmem:[%s2 + $0x80] sm:$0xf] %v781
  %910 = vst [vmem:[%s2 + $0x84] sm:$0xf] %v782
  %911 = vst [vmem:[%s2 + $0x88] sm:$0xf] %v783
  %912 = vst [vmem:[%s2 + $0x8c] sm:$0xf] %v784
  %913 = vst [vmem:[%s2 + $0x90] sm:$0xf] %v785
  %914 = vst [vmem:[%s2 + $0x94] sm:$0xf] %v786
  %915 = vst [vmem:[%s2 + $0x98] sm:$0xf] %v787
  %916 = vst [vmem:[%s2 + $0x9c] sm:$0xf] %v788
  %917 = vst [vmem:[%s2 + $0xa0] sm:$0xf] %v789
  %918 = vst [vmem:[%s2 + $0xa4] sm:$0xf] %v790
  %919 = vst [vmem:[%s2 + $0xa8] sm:$0xf] %v791
  %920 = vst [vmem:[%s2 + $0xac] sm:$0xf] %v792
  %921 = vst [vmem:[%s2 + $0xb0] sm:$0xf] %v793
  %922 = vst [vmem:[%s2 + $0xb4] sm:$0xf] %v794
  %923 = vst [vmem:[%s2 + $0xb8] sm:$0xf] %v795
  %924 = vst [vmem:[%s2 + $0xbc] sm:$0xf] %v796
  %925 = vst [vmem:[%s2 + $0xc0] sm:$0xf] %v797
  %926 = vst [vmem:[%s2 + $0xc4] sm:$0xf] %v798
  %927 = vst [vmem:[%s2 + $0xc8] sm:$0xf] %v799
  %928 = vst [vmem:[%s2 + $0xcc] sm:$0xf] %v800
  %929 = vst [vmem:[%s2 + $0xd0] sm:$0xf] %v801
  %930 = vst [vmem:[%s2 + $0xd4] sm:$0xf] %v802
  %931 = vst [vmem:[%s2 + $0xd8] sm:$0xf] %v803
  %932 = vst [vmem:[%s2 + $0xdc] sm:$0xf] %v804
  %933 = vst [vmem:[%s2 + $0xe0] sm:$0xf] %v805
  %934 = vst [vmem:[%s2 + $0xe4] sm:$0xf] %v806
  %935 = vst [vmem:[%s2 + $0xe8] sm:$0xf] %v807
  %936 = vst [vmem:[%s2 + $0xec] sm:$0xf] %v808
  %937 = vst [vmem:[%s2 + $0xf0] sm:$0xf] %v809
  %938 = vst [vmem:[%s2 + $0xf4] sm:$0xf] %v810
  %939 = vst [vmem:[%s2 + $0xf8] sm:$0xf] %v811
  %940 = vst [vmem:[%s2 + $0xfc] sm:$0xf] %v812
  // Predicated region
  $region10: #{gcn_forward.3} parent=0 // pred_check
    _
  $region11: #{gcn_forward.3} parent=0 // pred_check_branch
    %942 = sbr.rel (0) target = $region13
  $region12: #{gcn_forward.3} parent=0 // pred_region
    _
  $region13: #{gcn_forward.3} parent=0 // pred_fallthru
    _
  // Predicated region
  $region14: #{gcn_forward.3} parent=0 // pred_check
    _
  $region15: #{gcn_forward.3} parent=0 // pred_check_branch
    %944 = sbr.rel (0) target = $region17
  $region16: #{gcn_forward.3} parent=0 // pred_region
    _
  $region17: #{gcn_forward.3} parent=0 // pred_fallthru
    _

// kernel: gcn_forward.5
$region0: #{gcn_forward.5}
  #allocation0 [shape = 'u32[]', space=smem, size = 0x4, offset = 0x4, fixed_abs, tag = 'smem constant byte address 0x4 - core index']
  #allocation1 [shape = 'u32[144,128]{1,0:T(1,128)}', space=vmem, size = 0x12000, scoped, tag = 'internal scratch']
  #allocation2 [shape = 's32[1]{0}', space=sflag, size = 0x4, scoped, tag = 'scoped memory for gcn_forward.5']
  #allocation3 [shape = 'u8[512]{0}', space=smem, size = 0x200, scoped, tag = 'prefetched SMEM operand 0']
  #allocation4 [shape = 'u8[2048]{0}', space=smem, size = 0x800, scoped, tag = 'prefetched SMEM operand 1']
  %s0 = inlined_call_operand.vmem [shape: s32[4], index: 0, kind: input, shape index: {}]
  %s1 = inlined_call_operand.vmem [shape: s32[4,4], index: 1, kind: input, shape index: {}]
  %s2 = inlined_call_operand.vmem [shape: bf16[512,512], index: 2, kind: input, shape index: {}]
  %s3 = inlined_call_operand.vmem [shape: bf16[512,128], index: 3, kind: input, shape index: {}]
  %s4 = inlined_call_operand.vmem [shape: f32[1,128], index: 4, kind: input, shape index: {}]
  %s5 = inlined_call_operand.hbm [shape: f32[512,128], index: 5, kind: output, shape index: {}]
  %s6 = sld [smem:[#allocation0]]
  $region98: #{gcn_forward.5} parent=0
    _
  %s8 = ssub.s32 1, %s6
  %s9 = scalar_select 0, %s8, %s6
  %s10 = sshll.u32 %s0, 4
  %s11 = int_to_ptr.vmem [resolvable:$true] %s10
  %13 = dma.vmem_to_smem %s11, 16, [#allocation3], [#allocation2]
  %s14 = sshll.u32 %s1, 4
  %s15 = int_to_ptr.vmem [resolvable:$true] %s14
  %17 = dma.vmem_to_smem %s15, 64, [#allocation4], [#allocation2]
  %18 = dma.done [#allocation2], 80
  %19 = sfence
  $region1: #{gcn_forward.5} parent=0
    #allocation5 [shape = 'u8[65536]{0}', space=vmem, size = 0x10000, scoped, tag = 'input window, operand 2']
    #allocation6 [shape = 'u8[131072]{0}', space=vmem, size = 0x20000, scoped, tag = 'output window, operand 0']
    #allocation7 [shape = 's32[2]{0}', space=sflag, size = 0x8, scoped, tag = 'scoped memory for gcn_forward.5']
    %20 = vsyncpa [#allocation7], 0
    %s21 = scalar_lea.sflag [#allocation7], 1
    %22 = vsyncpa %s21, 0
    loop: start=0, step=1, limit=18
    $region2: #{gcn_forward.5} parent=1 // loop_pre_header
      _
    $region3: #{gcn_forward.5} parent=1 // loop_header
      %s24 = sphi 0, %s28
      %p25 = scmp.ge.s32.totalorder %s24, 18
      %s31 = sphi 0, %s43
      %s32 = sphi 0, %s39
      %s33 = sphi 0, %s31
      %s34 = sphi 0, %s32
      %s35 = sphi 0, %s33
      %s36 = sphi 0, %s34
      %s64 = sphi 0, %s66
      %s67 = sphi 0, %s64
      %s68 = sphi 0, %s67
      %s84 = sphi 0, %s68
      %s106 = sphi 0, %s108
      %s109 = sphi 0, %s106
      %s110 = sphi 0, %s109
      %s126 = sphi 0, %s110
      %s130 = sphi 0, %s130
      %s132 = sphi 0, %s130
      %s133 = sphi 0, %s132
      %s147 = sphi 0, %s133
      %s153 = sphi 0, %s155
      %s156 = sphi 0, %s153
      %s157 = sphi 0, %s156
      %s173 = sphi 0, %s157
    $region4: #{gcn_forward.5} parent=1 // loop_header_branch
      %27 = sbr.rel (%p25) target = $region8
    $region5: #{gcn_forward.5} parent=1 // loop_body
      %s29 = ssub.s32 %s24, 1
      %s30 = ssub.s32 %s24, 2
      %s37 = sadd.s32 1, %s32
      %p38 = scmp.ge.s32.totalorder %s37, 4
      %s39 = scalar_select %p38, 0, %s37
      %s40 = sadd.s32 1, %s31
      %s41 = scalar_select %p38, %s40, %s31
      %p42 = scmp.ge.s32.totalorder %s41, 4
      %s43 = scalar_select %p42, 0, %s41
      %s44 = sshra.s32 %s32, 7
      %s45 = sand.u32 %s32, 127
      %s46 = sadd.s32 %s44, %s31
      %s47 = smul.u32 %s46, 128
      %s48 = sshra.s32 %s32, 7
      %s49 = sand.u32 %s32, 127
      %s50 = sadd.s32 %s47, %s49
      %s51 = sld [smem:[#allocation4 + %s50]]
      %s52 = sshra.s32 %s39, 7
      %s53 = sand.u32 %s39, 127
      %s54 = sadd.s32 %s52, %s43
      %s55 = smul.u32 %s54, 128
      %s56 = sshra.s32 %s39, 7
      %s57 = sand.u32 %s39, 127
      %s58 = sadd.s32 %s55, %s57
      %s59 = sld [smem:[#allocation4 + %s58]]
      %s60 = ssub.s32 %s31, %s43
      %s61 = ssub.s32 %s51, %s59
      %s62 = sor.u32 %s60, %s61
      %p63 = scmp.eq.s32.totalorder %s62, 0
      %s65 = sadd.s32 %s64, 1
      %s66 = scalar_select %p63, %s64, %s65
      %p69 = pneg %p63
      %p70 = scmp.eq.s32.totalorder %s24, 15
      %p71 = por %p69, %p70
      %p72 = scmp.ne.s32.totalorder %s64, %s67
      %p73 = scmp.eq.s32.totalorder %s24, 0
      %p74 = por %p72, %p73
      %p75 = scmp.ne.s32.totalorder %s64, %s67
      %p76 = scmp.eq.s32.totalorder %s29, 15
      %p77 = por %p75, %p76
      %p78 = scmp.ne.s32.totalorder %s67, %s68
      %p79 = scmp.eq.s32.totalorder %s29, 0
      %p80 = por %p78, %p79
      %p81 = scmp.ne.s32.totalorder %s67, %s68
      %p82 = scmp.eq.s32.totalorder %s30, 15
      %p83 = por %p81, %p82
      %p85 = scmp.ne.s32.totalorder %s68, %s84
      %p86 = scmp.eq.s32.totalorder %s30, 0
      %p87 = por %p85, %p86
      %s88 = sshra.s32 %s32, 7
      %s89 = sand.u32 %s32, 127
      %s90 = sadd.s32 %s88, %s31
      %s91 = smul.u32 %s90, 128
      %s92 = sshra.s32 %s32, 7
      %s93 = sand.u32 %s32, 127
      %s94 = sadd.s32 %s91, %s93
      %s95 = sld [smem:[#allocation4 + %s94]]
      %s96 = sshra.s32 %s39, 7
      %s97 = sand.u32 %s39, 127
      %s98 = sadd.s32 %s96, %s43
      %s99 = smul.u32 %s98, 128
      %s100 = sshra.s32 %s39, 7
      %s101 = sand.u32 %s39, 127
      %s102 = sadd.s32 %s99, %s101
      %s103 = sld [smem:[#allocation4 + %s102]]
      %s104 = ssub.s32 %s95, %s103
      %p105 = scmp.eq.s32.totalorder %s104, 0
      %s107 = sadd.s32 %s106, 1
      %s108 = scalar_select %p105, %s106, %s107
      %p111 = pneg %p105
      %p112 = scmp.eq.s32.totalorder %s24, 15
      %p113 = por %p111, %p112
      %p114 = scmp.ne.s32.totalorder %s106, %s109
      %p115 = scmp.eq.s32.totalorder %s24, 0
      %p116 = por %p114, %p115
      %p117 = scmp.ne.s32.totalorder %s106, %s109
      %p118 = scmp.eq.s32.totalorder %s29, 15
      %p119 = por %p117, %p118
      %p120 = scmp.ne.s32.totalorder %s109, %s110
      %p121 = scmp.eq.s32.totalorder %s29, 0
      %p122 = por %p120, %p121
      %p123 = scmp.ne.s32.totalorder %s109, %s110
      %p124 = scmp.eq.s32.totalorder %s30, 15
      %p125 = por %p123, %p124
      %p127 = scmp.ne.s32.totalorder %s110, %s126
      %p128 = scmp.eq.s32.totalorder %s30, 0
      %p129 = por %p127, %p128
      %s131 = sadd.s32 %s130, 1
      %p134 = scmp.eq.s32.totalorder %s24, 15
      %p135 = scmp.ne.s32.totalorder %s130, %s132
      %p136 = scmp.eq.s32.totalorder %s24, 0
      %p137 = por %p135, %p136
      %p138 = scmp.ne.s32.totalorder %s130, %s132
      %p139 = scmp.eq.s32.totalorder %s29, 15
      %p140 = por %p138, %p139
      %p141 = scmp.ne.s32.totalorder %s132, %s133
      %p142 = scmp.eq.s32.totalorder %s29, 0
      %p143 = por %p141, %p142
      %p144 = scmp.ne.s32.totalorder %s132, %s133
      %p145 = scmp.eq.s32.totalorder %s30, 15
      %p146 = por %p144, %p145
      %p148 = scmp.ne.s32.totalorder %s133, %s147
      %p149 = scmp.eq.s32.totalorder %s30, 0
      %p150 = por %p148, %p149
      %s151 = ssub.s32 %s31, %s43
      %p152 = scmp.eq.s32.totalorder %s151, 0
      %s154 = sadd.s32 %s153, 1
      %s155 = scalar_select %p152, %s153, %s154
      %p158 = pneg %p152
      %p159 = scmp.eq.s32.totalorder %s24, 15
      %p160 = por %p158, %p159
      %p161 = scmp.ne.s32.totalorder %s153, %s156
      %p162 = scmp.eq.s32.totalorder %s24, 0
      %p163 = por %p161, %p162
      %p164 = scmp.ne.s32.totalorder %s153, %s156
      %p165 = scmp.eq.s32.totalorder %s29, 15
      %p166 = por %p164, %p165
      %p167 = scmp.ne.s32.totalorder %s156, %s157
      %p168 = scmp.eq.s32.totalorder %s29, 0
      %p169 = por %p167, %p168
      %p170 = scmp.ne.s32.totalorder %s156, %s157
      %p171 = scmp.eq.s32.totalorder %s30, 15
      %p172 = por %p170, %p171
      %p174 = scmp.ne.s32.totalorder %s157, %s173
      %p175 = scmp.eq.s32.totalorder %s30, 0
      %p176 = por %p174, %p175
      %p177 = scmp.le.s32.totalorder 1, %s24
      %p178 = scmp.lt.s32.totalorder %s24, 17
      %p179 = pnand %p177, %p178
      %p180 = pneg %p179
      // Predicated region
      $region9: #{gcn_forward.5} parent=5 // pred_check
        _
      $region10: #{gcn_forward.5} parent=5 // pred_check_branch
        %182 = sbr.rel (%p179) target = $region12
      $region11: #{gcn_forward.5} parent=5 // pred_region
        %s183 = ssub.s32 %s24, 1
        // Predicated region
        $region13: #{gcn_forward.5} parent=11 // pred_check
          %p184 = pneg %p143
        $region14: #{gcn_forward.5} parent=11 // pred_check_branch
          %186 = sbr.rel (%p184) target = $region16
        $region15: #{gcn_forward.5} parent=11 // pred_region
          _
        $region16: #{gcn_forward.5} parent=11 // pred_fallthru
          _
      $region12: #{gcn_forward.5} parent=5 // pred_fallthru
        _
      %p187 = scmp.lt.s32.totalorder %s24, 16
      // Predicated region
      $region17: #{gcn_forward.5} parent=5 // pred_check
        %p188 = pneg %p187
      $region18: #{gcn_forward.5} parent=5 // pred_check_branch
        %190 = sbr.rel (%p188) target = $region20
      $region19: #{gcn_forward.5} parent=5 // pred_region
        // Predicated region
        $region21: #{gcn_forward.5} parent=19 // pred_check
          %p191 = pneg %p74
        $region22: #{gcn_forward.5} parent=19 // pred_check_branch
          %193 = sbr.rel (%p191) target = $region24
        $region23: #{gcn_forward.5} parent=19 // pred_region
          %s194 = sand.u32 %s64, 1
          %s195 = sand.u32 %s64, 1
          %s196 = smul.addr %s195, 64
          %s197 = scalar_lea.vmem [#allocation5], %s196
          %s198 = sshra.s32 %s32, 7
          %s199 = sand.u32 %s32, 127
          %s200 = sadd.s32 %s198, %s31
          %s201 = smul.u32 %s200, 128
          %s202 = sshra.s32 %s32, 7
          %s203 = sand.u32 %s32, 127
          %s204 = sadd.s32 %s201, %s203
          %s205 = sld [smem:[#allocation4 + %s204]]
          %s206 = smul.u32 16, %s31
          %s207 = smul.addr %s206, 4
          %s208 = sadd.s32 %s205, %s207
          %s209 = smul.addr %s208, 4
          %s210 = scalar_lea.vmem %s2, %s209
          // Predicated region
          $region25: #{gcn_forward.5} parent=23 // pred_check
            _
          $region26: #{gcn_forward.5} parent=23 // pred_check_branch
            %212 = sbr.rel (0) target = $region28
          $region27: #{gcn_forward.5} parent=23 // pred_region
            // Predicated region
            $region29: #{gcn_forward.5} parent=27 // pred_check
              _
            $region30: #{gcn_forward.5} parent=27 // pred_check_branch
              %214 = sbr.rel target = $region32
            $region31: #{gcn_forward.5} parent=27 // pred_region
              // Predicated region
              $region44: #{gcn_forward.5} parent=31 // pred_check
                _
              $region45: #{gcn_forward.5} parent=31 // pred_check_branch
                %260 = sbr.rel (0) target = $region47
              $region46: #{gcn_forward.5} parent=31 // pred_region
                loop: start=0, step=1, limit=1
                $region48: #{gcn_forward.5} parent=46 // loop_pre_header
                  _
                $region49: #{gcn_forward.5} parent=46 // loop_header
                  %s262 = sphi 0, %s266
                  %p263 = scmp.ge.s32.totalorder %s262, 1
                  %s267 = sphi %s210, %s210
                  %s268 = sphi %s197, %s197
                $region50: #{gcn_forward.5} parent=46 // loop_header_branch
                  %265 = sbr.rel (%p263) target = $region54
                $region51: #{gcn_forward.5} parent=46 // loop_body
                  _
                $region52: #{gcn_forward.5} parent=46 // loop_footer
                  %s266 = sadd.s32 1, %s262
                $region53: #{gcn_forward.5} parent=46 // loop_footer_branch
                  %261 = sbr.rel target = $region49
                $region54: #{gcn_forward.5} parent=46 // loop_exit
                  _
                %s270 = ssub.s32 16, 1
                loop: start=0, step=1, limit=1
                $region55: #{gcn_forward.5} parent=46 // loop_pre_header
                  _
                $region56: #{gcn_forward.5} parent=46 // loop_header
                  %s272 = sphi 0, %s276
                  %p273 = scmp.ge.s32.totalorder %s272, 1
                  %s277 = sphi %s210, %s210
                  %s278 = sphi %s197, %s197
                $region57: #{gcn_forward.5} parent=46 // loop_header_branch
                  %275 = sbr.rel (%p273) target = $region61
                $region58: #{gcn_forward.5} parent=46 // loop_body
                  %v279 = vld [vmem:[%s277] sm:%s270]
                  %280 = vst [vmem:[%s278] sm:%s270] %v279
                  %v281 = vld [vmem:[%s277 + $0x10] sm:%s270]
                  %282 = vst [vmem:[%s278 + $0x4] sm:%s270] %v281
                  %v283 = vld [vmem:[%s277 + $0x20] sm:%s270]
                  %284 = vst [vmem:[%s278 + $0x8] sm:%s270] %v283
                  %v285 = vld [vmem:[%s277 + $0x30] sm:%s270]
                  %286 = vst [vmem:[%s278 + $0xc] sm:%s270] %v285
                  %v287 = vld [vmem:[%s277 + $0x40] sm:%s270]
                  %288 = vst [vmem:[%s278 + $0x10] sm:%s270] %v287
                  %v289 = vld [vmem:[%s277 + $0x50] sm:%s270]
                  %290 = vst [vmem:[%s278 + $0x14] sm:%s270] %v289
                  %v291 = vld [vmem:[%s277 + $0x60] sm:%s270]
                  %292 = vst [vmem:[%s278 + $0x18] sm:%s270] %v291
                  %v293 = vld [vmem:[%s277 + $0x70] sm:%s270]
                  %294 = vst [vmem:[%s278 + $0x1c] sm:%s270] %v293
                  %v295 = vld [vmem:[%s277 + $0x80] sm:%s270]
                  %296 = vst [vmem:[%s278 + $0x20] sm:%s270] %v295
                  %v297 = vld [vmem:[%s277 + $0x90] sm:%s270]
                  %298 = vst [vmem:[%s278 + $0x24] sm:%s270] %v297
                  %v299 = vld [vmem:[%s277 + $0xa0] sm:%s270]
                  %300 = vst [vmem:[%s278 + $0x28] sm:%s270] %v299
                  %v301 = vld [vmem:[%s277 + $0xb0] sm:%s270]
                  %302 = vst [vmem:[%s278 + $0x2c] sm:%s270] %v301
                  %v303 = vld [vmem:[%s277 + $0xc0] sm:%s270]
                  %304 = vst [vmem:[%s278 + $0x30] sm:%s270] %v303
                  %v305 = vld [vmem:[%s277 + $0xd0] sm:%s270]
                  %306 = vst [vmem:[%s278 + $0x34] sm:%s270] %v305
                  %v307 = vld [vmem:[%s277 + $0xe0] sm:%s270]
                  %308 = vst [vmem:[%s278 + $0x38] sm:%s270] %v307
                  %v309 = vld [vmem:[%s277 + $0xf0] sm:%s270]
                  %310 = vst [vmem:[%s278 + $0x3c] sm:%s270] %v309
                $region59: #{gcn_forward.5} parent=46 // loop_footer
                  %s276 = sadd.s32 1, %s272
                $region60: #{gcn_forward.5} parent=46 // loop_footer_branch
                  %271 = sbr.rel target = $region56
                $region61: #{gcn_forward.5} parent=46 // loop_exit
                  _
              $region47: #{gcn_forward.5} parent=31 // pred_fallthru
                _
            $region32: #{gcn_forward.5} parent=27 // pred_fallthru
              _
            // Predicated region
            $region33: #{gcn_forward.5} parent=27 // pred_check
              _
            $region34: #{gcn_forward.5} parent=27 // pred_check_branch
              %216 = sbr.rel (0) target = $region36
            $region35: #{gcn_forward.5} parent=27 // pred_region
              %s218 = ssub.s32 16, 1
              loop: start=0, step=1, limit=1
              $region37: #{gcn_forward.5} parent=35 // loop_pre_header
                _
              $region38: #{gcn_forward.5} parent=35 // loop_header
                %s220 = sphi 0, %s224
                %p221 = scmp.ge.s32.totalorder %s220, 1
                %s225 = sphi %s210, %s210
                %s226 = sphi %s197, %s197
              $region39: #{gcn_forward.5} parent=35 // loop_header_branch
                %223 = sbr.rel (%p221) target = $region43
              $region40: #{gcn_forward.5} parent=35 // loop_body
                %v227 = vld [vmem:[%s225] sm:%s218]
                %228 = vst [vmem:[%s226] sm:%s218] %v227
                %v229 = vld [vmem:[%s225 + $0x10] sm:%s218]
                %230 = vst [vmem:[%s226 + $0x4] sm:%s218] %v229
                %v231 = vld [vmem:[%s225 + $0x20] sm:%s218]
                %232 = vst [vmem:[%s226 + $0x8] sm:%s218] %v231
                %v233 = vld [vmem:[%s225 + $0x30] sm:%s218]
                %234 = vst [vmem:[%s226 + $0xc] sm:%s218] %v233
                %v235 = vld [vmem:[%s225 + $0x40] sm:%s218]
                %236 = vst [vmem:[%s226 + $0x10] sm:%s218] %v235
                %v237 = vld [vmem:[%s225 + $0x50] sm:%s218]
                %238 = vst [vmem:[%s226 + $0x14] sm:%s218] %v237
                %v239 = vld [vmem:[%s225 + $0x60] sm:%s218]
                %240 = vst [vmem:[%s226 + $0x18] sm:%s218] %v239
                %v241 = vld [vmem:[%s225 + $0x70] sm:%s218]
                %242 = vst [vmem:[%s226 + $0x1c] sm:%s218] %v241
                %v243 = vld [vmem:[%s225 + $0x80] sm:%s218]
                %244 = vst [vmem:[%s226 + $0x20] sm:%s218] %v243
                %v245 = vld [vmem:[%s225 + $0x90] sm:%s218]
                %246 = vst [vmem:[%s226 + $0x24] sm:%s218] %v245
                %v247 = vld [vmem:[%s225 + $0xa0] sm:%s218]
                %248 = vst [vmem:[%s226 + $0x28] sm:%s218] %v247
                %v249 = vld [vmem:[%s225 + $0xb0] sm:%s218]
                %250 = vst [vmem:[%s226 + $0x2c] sm:%s218] %v249
                %v251 = vld [vmem:[%s225 + $0xc0] sm:%s218]
                %252 = vst [vmem:[%s226 + $0x30] sm:%s218] %v251
                %v253 = vld [vmem:[%s225 + $0xd0] sm:%s218]
                %254 = vst [vmem:[%s226 + $0x34] sm:%s218] %v253
                %v255 = vld [vmem:[%s225 + $0xe0] sm:%s218]
                %256 = vst [vmem:[%s226 + $0x38] sm:%s218] %v255
                %v257 = vld [vmem:[%s225 + $0xf0] sm:%s218]
                %258 = vst [vmem:[%s226 + $0x3c] sm:%s218] %v257
              $region41: #{gcn_forward.5} parent=35 // loop_footer
                %s224 = sadd.s32 1, %s220
              $region42: #{gcn_forward.5} parent=35 // loop_footer_branch
                %219 = sbr.rel target = $region38
              $region43: #{gcn_forward.5} parent=35 // loop_exit
                _
            $region36: #{gcn_forward.5} parent=27 // pred_fallthru
              _
          $region28: #{gcn_forward.5} parent=23 // pred_fallthru
            _
          %311 = vnop
        $region24: #{gcn_forward.5} parent=19 // pred_fallthru
          _
        // Predicated region
        $region62: #{gcn_forward.5} parent=19 // pred_check
          %p312 = pneg %p116
        $region63: #{gcn_forward.5} parent=19 // pred_check_branch
          %314 = sbr.rel (%p312) target = $region65
        $region64: #{gcn_forward.5} parent=19 // pred_region
          %s315 = sshra.s32 %s32, 7
          %s316 = sand.u32 %s32, 127
          %s317 = sadd.s32 %s315, %s31
          %s318 = smul.u32 %s317, 128
          %s319 = sshra.s32 %s32, 7
          %s320 = sand.u32 %s32, 127
          %s321 = sadd.s32 %s318, %s320
          %s322 = sld [smem:[#allocation4 + %s321]]
          %s323 = smul.u32 16, %s322
          %p324 = scmp.lt.s32.totalorder %s323, 63
          %s325 = scalar_select %p324, %s323, 63
          %s326 = smul.addr %s325, 4
          %s327 = scalar_lea.vmem %s3, %s326
          %s328 = sshra.s32 %s32, 7
          %s329 = sand.u32 %s32, 127
          %s330 = sadd.s32 %s328, %s31
          %s331 = smul.u32 %s330, 128
          %s332 = sshra.s32 %s32, 7
          %s333 = sand.u32 %s32, 127
          %s334 = sadd.s32 %s331, %s333
          %s335 = sld [smem:[#allocation4 + %s334]]
          %s336 = smul.u32 16, %s335
        $region65: #{gcn_forward.5} parent=19 // pred_fallthru
          _
      $region20: #{gcn_forward.5} parent=5 // pred_fallthru
        _
      %p337 = scmp.le.s32.totalorder 1, %s24
      %p338 = scmp.lt.s32.totalorder %s24, 17
      %p339 = pnand %p337, %p338
      %p340 = pneg %p339
      // Predicated region
      $region66: #{gcn_forward.5} parent=5 // pred_check
        _
      $region67: #{gcn_forward.5} parent=5 // pred_check_branch
        %342 = sbr.rel (%p339) target = $region69
      $region68: #{gcn_forward.5} parent=5 // pred_region
        %s343 = ssub.s32 %s24, 1
        %s344 = sand.u32 %s67, 1
        %s345 = sand.u32 %s67, 1
        %s346 = smul.addr %s345, 64
        %s347 = scalar_lea.vmem [#allocation5], %s346
        // Predicated region
        $region70: #{gcn_forward.5} parent=68 // pred_check
          %p348 = pneg %p80
        $region71: #{gcn_forward.5} parent=68 // pred_check_branch
          %350 = sbr.rel (%p348) target = $region73
        $region72: #{gcn_forward.5} parent=68 // pred_region
          _
        $region73: #{gcn_forward.5} parent=68 // pred_fallthru
          _
        %s351 = sand.u32 %s67, 1
        %s352 = sand.u32 %s67, 1
        %s353 = smul.addr %s352, 64
        %s354 = scalar_lea.vmem [#allocation5], %s353
        %p355 = pneg %p80
        %p356 = pneg %p77
        %s357 = sshra.s32 %s34, 7
        %s358 = sand.u32 %s34, 127
        %s359 = sadd.s32 %s357, %s33
        %s360 = smul.u32 %s359, 128
        %s361 = sshra.s32 %s34, 7
        %s362 = sand.u32 %s34, 127
        %s363 = sadd.s32 %s360, %s362
        %s364 = sld [smem:[#allocation4 + %s363]]
        %s365 = smul.u32 16, %s364
        %p366 = scmp.lt.s32.totalorder %s365, 63
        %s367 = scalar_select %p366, %s365, 63
        %s368 = smul.addr %s367, 4
        %s369 = scalar_lea.vmem %s3, %s368
        %p370 = pneg %p122
        %p371 = pneg %p119
        %p372 = pneg %p143
        %p373 = pneg %p140
        %p374 = pneg %p169
        %p375 = pneg %p166
        %s376 = sand.u32 %s156, 1
        %s377 = scalar_lea.sflag [#allocation7], %s376
        %s378 = sand.u32 %s156, 1
        %s379 = smul.addr %s378, 128
        %s380 = scalar_lea.vmem [#allocation6], %s379
        %s381 = sshra.s32 %s34, 7
        %s382 = sand.u32 %s34, 127
        %s383 = sadd.s32 %s381, %s33
        %s384 = smul.u32 %s383, 128
        %s385 = sshra.s32 %s34, 7
        %s386 = sand.u32 %s34, 127
        %s387 = sadd.s32 %s384, %s386
        %s388 = sld [smem:[#allocation4 + %s387]]
        %s389 = smul.u32 16, %s33
        %s390 = sshra.s32 %s34, 7
        %s391 = sand.u32 %s34, 127
        %s392 = sadd.s32 %s390, %s33
        %s393 = smul.u32 %s392, 128
        %s394 = sshra.s32 %s34, 7
        %s395 = sand.u32 %s34, 127
        %s396 = sadd.s32 %s393, %s395
        %s397 = sld [smem:[#allocation4 + %s396]]
        %s398 = smul.u32 16, %s397
        %p399 = scmp.lt.s32.totalorder %s398, 63
        %s400 = scalar_select %p399, %s398, 63
        %s401 = smul.addr %s400, 4
        %s402 = scalar_lea.vmem %s3, %s401
        %s403 = sshra.s32 %s34, 7
        %s404 = sand.u32 %s34, 127
        %s405 = sadd.s32 %s403, %s33
        %s406 = smul.u32 %s405, 128
        %s407 = sshra.s32 %s34, 7
        %s408 = sand.u32 %s34, 127
        %s409 = sadd.s32 %s406, %s408
        %s410 = sld [smem:[#allocation4 + %s409]]
        %s411 = smul.u32 16, %s410
        %s412 = smul.u32 16, %s33
        %p414 = scmp.eq.s32.totalorder %s34, 0
        // Predicated region
        $region74: #{gcn_forward.5} parent=68 // pred_check
          %p415 = pneg %p414
        $region75: #{gcn_forward.5} parent=68 // pred_check_branch
          %417 = sbr.rel (%p415) target = $region77
        $region76: #{gcn_forward.5} parent=68 // pred_region
          %418 = vst [vmem:[%s380] sm:$0xff] 0.0
          %419 = vst [vmem:[%s380 + $0x8] sm:$0xff] 0.0
          %420 = vst [vmem:[%s380 + $0x10] sm:$0xff] 0.0
          %421 = vst [vmem:[%s380 + $0x18] sm:$0xff] 0.0
          %422 = vst [vmem:[%s380 + $0x20] sm:$0xff] 0.0
          %423 = vst [vmem:[%s380 + $0x28] sm:$0xff] 0.0
          %424 = vst [vmem:[%s380 + $0x30] sm:$0xff] 0.0
          %425 = vst [vmem:[%s380 + $0x38] sm:$0xff] 0.0
          %426 = vst [vmem:[%s380 + $0x40] sm:$0xff] 0.0
          %427 = vst [vmem:[%s380 + $0x48] sm:$0xff] 0.0
          %428 = vst [vmem:[%s380 + $0x50] sm:$0xff] 0.0
          %429 = vst [vmem:[%s380 + $0x58] sm:$0xff] 0.0
          %430 = vst [vmem:[%s380 + $0x60] sm:$0xff] 0.0
          %431 = vst [vmem:[%s380 + $0x68] sm:$0xff] 0.0
          %432 = vst [vmem:[%s380 + $0x70] sm:$0xff] 0.0
          %433 = vst [vmem:[%s380 + $0x78] sm:$0xff] 0.0
        $region77: #{gcn_forward.5} parent=68 // pred_fallthru
          _
        %s434 = sld [smem:[#allocation3 + %s33]]
        %p435 = scmp.lt.s32.totalorder %s34, %s434
        // Predicated region
        $region78: #{gcn_forward.5} parent=68 // pred_check
          %p436 = pneg %p435
        $region79: #{gcn_forward.5} parent=68 // pred_check_branch
          %438 = sbr.rel (%p436) target = $region81
        $region80: #{gcn_forward.5} parent=68 // pred_region
          %v439 = vld [vmem:[%s380] sm:$0xff]
          %v440 = vld [vmem:[%s380 + $0x8] sm:$0xff]
          %v441 = vld [vmem:[%s380 + $0x10] sm:$0xff]
          %v442 = vld [vmem:[%s380 + $0x18] sm:$0xff]
          %v443 = vld [vmem:[%s380 + $0x20] sm:$0xff]
          %v444 = vld [vmem:[%s380 + $0x28] sm:$0xff]
          %v445 = vld [vmem:[%s380 + $0x30] sm:$0xff]
          %v446 = vld [vmem:[%s380 + $0x38] sm:$0xff]
          %v447 = vld [vmem:[%s380 + $0x40] sm:$0xff]
          %v448 = vld [vmem:[%s380 + $0x48] sm:$0xff]
          %v449 = vld [vmem:[%s380 + $0x50] sm:$0xff]
          %v450 = vld [vmem:[%s380 + $0x58] sm:$0xff]
          %v451 = vld [vmem:[%s380 + $0x60] sm:$0xff]
          %v452 = vld [vmem:[%s380 + $0x68] sm:$0xff]
          %v453 = vld [vmem:[%s380 + $0x70] sm:$0xff]
          %v454 = vld [vmem:[%s380 + $0x78] sm:$0xff]
          %v455 = vld [vmem:[%s347] sm:$0xf]
          %v456 = vld [vmem:[%s347 + $0x4] sm:$0xf]
          %v457 = vld [vmem:[%s347 + $0x8] sm:$0xf]
          %v458 = vld [vmem:[%s347 + $0xc] sm:$0xf]
          %v459 = vld [vmem:[%s347 + $0x10] sm:$0xf]
          %v460 = vld [vmem:[%s347 + $0x14] sm:$0xf]
          %v461 = vld [vmem:[%s347 + $0x18] sm:$0xf]
          %v462 = vld [vmem:[%s347 + $0x1c] sm:$0xf]
          %v463 = vld [vmem:[%s347 + $0x20] sm:$0xf]
          %v464 = vld [vmem:[%s347 + $0x24] sm:$0xf]
          %v465 = vld [vmem:[%s347 + $0x28] sm:$0xf]
          %v466 = vld [vmem:[%s347 + $0x2c] sm:$0xf]
          %v467 = vld [vmem:[%s347 + $0x30] sm:$0xf]
          %v468 = vld [vmem:[%s347 + $0x34] sm:$0xf]
          %v469 = vld [vmem:[%s347 + $0x38] sm:$0xf]
          %v470 = vld [vmem:[%s347 + $0x3c] sm:$0xf]
          %v471 = vld [vmem:[%s402] sm:$0xf]
          %v472 = vld [vmem:[%s402 + $0x4] sm:$0xf]
          %v473 = vld [vmem:[%s402 + $0x8] sm:$0xf]
          %v474 = vld [vmem:[%s402 + $0xc] sm:$0xf]
          %v475 = vld [vmem:[%s402 + $0x10] sm:$0xf]
          %v476 = vld [vmem:[%s402 + $0x14] sm:$0xf]
          %v477 = vld [vmem:[%s402 + $0x18] sm:$0xf]
          %v478 = vld [vmem:[%s402 + $0x1c] sm:$0xf]
          %v479 = vld [vmem:[%s402 + $0x20] sm:$0xf]
          %v480 = vld [vmem:[%s402 + $0x24] sm:$0xf]
          %v481 = vld [vmem:[%s402 + $0x28] sm:$0xf]
          %v482 = vld [vmem:[%s402 + $0x2c] sm:$0xf]
          %v483 = vld [vmem:[%s402 + $0x30] sm:$0xf]
          %v484 = vld [vmem:[%s402 + $0x34] sm:$0xf]
          %v485 = vld [vmem:[%s402 + $0x38] sm:$0xf]
          %v486 = vld [vmem:[%s402 + $0x3c] sm:$0xf]
          %v503 = vunpack.c.l.b16 %v455
          %v504 = vunpack.c.l.b16 %v456
          %v505 = vunpack.c.l.b16 %v457
          %v506 = vunpack.c.l.b16 %v458
          %v507 = vunpack.c.l.b16 %v459
          %v508 = vunpack.c.l.b16 %v460
          %v509 = vunpack.c.l.b16 %v461
          %v510 = vunpack.c.l.b16 %v462
          %v511 = vunpack.c.l.b16 %v463
          %v512 = vunpack.c.l.b16 %v464
          %v513 = vunpack.c.l.b16 %v465
          %v514 = vunpack.c.l.b16 %v466
          %v515 = vunpack.c.l.b16 %v467
          %v516 = vunpack.c.l.b16 %v468
          %v517 = vunpack.c.l.b16 %v469
          %v518 = vunpack.c.l.b16 %v470
          %v519 = vpack.c.b16 %v504, %v503
          %v520 = vpack.c.b16 %v506, %v505
          %v521 = vpack.c.b16 %v508, %v507
          %v522 = vpack.c.b16 %v510, %v509
          %v523 = vpack.c.b16 %v512, %v511
          %v524 = vpack.c.b16 %v514, %v513
          %v525 = vpack.c.b16 %v516, %v515
          %v526 = vpack.c.b16 %v518, %v517
          %v551 = vunpack.c.l.b16 %v471
          %v552 = vunpack.c.l.b16 %v472
          %v553 = vunpack.c.l.b16 %v473
          %v554 = vunpack.c.l.b16 %v474
          %v555 = vunpack.c.l.b16 %v475
          %v556 = vunpack.c.l.b16 %v476
          %v557 = vunpack.c.l.b16 %v477
          %v558 = vunpack.c.l.b16 %v478
          %v559 = vunpack.c.l.b16 %v479
          %v560 = vunpack.c.l.b16 %v480
          %v561 = vunpack.c.l.b16 %v481
          %v562 = vunpack.c.l.b16 %v482
          %v563 = vunpack.c.l.b16 %v483
          %v564 = vunpack.c.l.b16 %v484
          %v565 = vunpack.c.l.b16 %v485
          %v566 = vunpack.c.l.b16 %v486
          %v567 = vpack.c.b16 %v552, %v551
          %v568 = vpack.c.b16 %v554, %v553
          %v569 = vpack.c.b16 %v556, %v555
          %v570 = vpack.c.b16 %v558, %v557
          %v571 = vpack.c.b16 %v560, %v559
          %v572 = vpack.c.b16 %v562, %v561
          %v573 = vpack.c.b16 %v564, %v563
          %v574 = vpack.c.b16 %v566, %v565
          %583 = vmatprep.subr.bf16.mxu0 0
          %584 = vmatpush1.bf16.msra.mxu0 %v574
          %585 = vmatprep.subr.bf16.mxu0 0
          %586 = vmatpush1.bf16.msra.mxu0 %v573
          %587 = vmatprep.subr.bf16.mxu0 0
          %588 = vmatpush1.bf16.msra.mxu0 %v572
          %589 = vmatprep.subr.bf16.mxu0 0
          %590 = vmatpush1.bf16.msra.mxu0 %v571
          %591 = vmatprep.subr.bf16.mxu0 0
          %592 = vmatpush1.bf16.msra.mxu0 %v570
          %593 = vmatprep.subr.bf16.mxu0 0
          %594 = vmatpush1.bf16.msra.mxu0 %v569
          %595 = vmatprep.subr.bf16.mxu0 0
          %596 = vmatpush1.bf16.msra.mxu0 %v568
          %597 = vmatprep.subr.bf16.mxu0 0
          %598 = vmatpush1.bf16.msra.mxu0 %v567
          %599 = vmatprep.subr.bf16.mxu0 0
          %600 = vmatpush2.bf16.msra.mxu0 0
          %601 = vmatprep.subr.bf16.mxu0 0
          %602 = vmatpush2.bf16.msra.mxu0 0
          %603 = vmatprep.subr.bf16.mxu0 0
          %604 = vmatpush2.bf16.msra.mxu0 0
          %605 = vmatprep.subr.bf16.mxu0 0
          %606 = vmatpush2.bf16.msra.mxu0 0
          %607 = vmatprep.subr.bf16.mxu0 0
          %608 = vmatpush2.bf16.msra.mxu0 0
          %609 = vmatprep.subr.bf16.mxu0 0
          %610 = vmatpush2.bf16.msra.mxu0 0
          %611 = vmatprep.subr.bf16.mxu0 0
          %612 = vmatpush2.bf16.msra.mxu0 0
          %613 = vmatprep.subr.bf16.mxu0 0
          %614 = vmatpush2.bf16.msra.mxu0 0
          %615 = vmatprep.mubr.bf16.mxu0 0
          %616 = vmatmul.mubr.bf16.gmra.mxu0 %v519
          %v617 = vpop.f32.mrf.mxu0
          %v618 = vadd.f32 0.0, %v617
          %v619 = vpop.f32.mrf.mxu0
          %v620 = vpop.f32.mrf.mxu0
          %v621 = vadd.f32 0.0, %v620
          %v622 = vpop.f32.mrf.mxu0
          %623 = vmatprep.mubr.bf16.mxu0 0
          %624 = vmatmul.mubr.bf16.gmra.mxu0 %v520
          %v625 = vpop.f32.mrf.mxu0
          %v626 = vadd.f32 0.0, %v625
          %v627 = vpop.f32.mrf.mxu0
          %v628 = vpop.f32.mrf.mxu0
          %v629 = vadd.f32 0.0, %v628
          %v630 = vpop.f32.mrf.mxu0
          %631 = vmatprep.mubr.bf16.mxu0 0
          %632 = vmatmul.mubr.bf16.gmra.mxu0 %v521
          %v633 = vpop.f32.mrf.mxu0
          %v634 = vadd.f32 0.0, %v633
          %v635 = vpop.f32.mrf.mxu0
          %v636 = vpop.f32.mrf.mxu0
          %v637 = vadd.f32 0.0, %v636
          %v638 = vpop.f32.mrf.mxu0
          %639 = vmatprep.mubr.bf16.mxu0 0
          %640 = vmatmul.mubr.bf16.gmra.mxu0 %v522
          %v641 = vpop.f32.mrf.mxu0
          %v642 = vadd.f32 0.0, %v641
          %v643 = vpop.f32.mrf.mxu0
          %v644 = vpop.f32.mrf.mxu0
          %v645 = vadd.f32 0.0, %v644
          %v646 = vpop.f32.mrf.mxu0
          %647 = vmatprep.mubr.bf16.mxu0 0
          %648 = vmatmul.mubr.bf16.gmra.mxu0 %v523
          %v649 = vpop.f32.mrf.mxu0
          %v650 = vadd.f32 0.0, %v649
          %v651 = vpop.f32.mrf.mxu0
          %v652 = vpop.f32.mrf.mxu0
          %v653 = vadd.f32 0.0, %v652
          %v654 = vpop.f32.mrf.mxu0
          %655 = vmatprep.mubr.bf16.mxu0 0
          %656 = vmatmul.mubr.bf16.gmra.mxu0 %v524
          %v657 = vpop.f32.mrf.mxu0
          %v658 = vadd.f32 0.0, %v657
          %v659 = vpop.f32.mrf.mxu0
          %v660 = vpop.f32.mrf.mxu0
          %v661 = vadd.f32 0.0, %v660
          %v662 = vpop.f32.mrf.mxu0
          %663 = vmatprep.mubr.bf16.mxu0 0
          %664 = vmatmul.mubr.bf16.gmra.mxu0 %v525
          %v665 = vpop.f32.mrf.mxu0
          %v666 = vadd.f32 0.0, %v665
          %v667 = vpop.f32.mrf.mxu0
          %v668 = vpop.f32.mrf.mxu0
          %v669 = vadd.f32 0.0, %v668
          %v670 = vpop.f32.mrf.mxu0
          %671 = vmatprep.mubr.bf16.mxu0 0
          %672 = vmatmul.mubr.bf16.gmra.mxu0 %v526
          %v673 = vpop.f32.mrf.mxu0
          %v674 = vadd.f32 0.0, %v673
          %v675 = vpop.f32.mrf.mxu0
          %v676 = vpop.f32.mrf.mxu0
          %v677 = vadd.f32 0.0, %v676
          %v678 = vpop.f32.mrf.mxu0
          %679 = vdwg.mxu0
          %v680 = vadd.f32 %v439, %v618
          %v681 = vadd.f32 %v440, %v621
          %v682 = vadd.f32 %v441, %v626
          %v683 = vadd.f32 %v442, %v629
          %v684 = vadd.f32 %v443, %v634
          %v685 = vadd.f32 %v444, %v637
          %v686 = vadd.f32 %v445, %v642
          %v687 = vadd.f32 %v446, %v645
          %v688 = vadd.f32 %v447, %v650
          %v689 = vadd.f32 %v448, %v653
          %v690 = vadd.f32 %v449, %v658
          %v691 = vadd.f32 %v450, %v661
          %v692 = vadd.f32 %v451, %v666
          %v693 = vadd.f32 %v452, %v669
          %v694 = vadd.f32 %v453, %v674
          %v695 = vadd.f32 %v454, %v677
          %696 = vst [vmem:[%s380] sm:$0xff] %v680
          %697 = vst [vmem:[%s380 + $0x8] sm:$0xff] %v681
          %698 = vst [vmem:[%s380 + $0x10] sm:$0xff] %v682
          %699 = vst [vmem:[%s380 + $0x18] sm:$0xff] %v683
          %700 = vst [vmem:[%s380 + $0x20] sm:$0xff] %v684
          %701 = vst [vmem:[%s380 + $0x28] sm:$0xff] %v685
          %702 = vst [vmem:[%s380 + $0x30] sm:$0xff] %v686
          %703 = vst [vmem:[%s380 + $0x38] sm:$0xff] %v687
          %704 = vst [vmem:[%s380 + $0x40] sm:$0xff] %v688
          %705 = vst [vmem:[%s380 + $0x48] sm:$0xff] %v689
          %706 = vst [vmem:[%s380 + $0x50] sm:$0xff] %v690
          %707 = vst [vmem:[%s380 + $0x58] sm:$0xff] %v691
          %708 = vst [vmem:[%s380 + $0x60] sm:$0xff] %v692
          %709 = vst [vmem:[%s380 + $0x68] sm:$0xff] %v693
          %710 = vst [vmem:[%s380 + $0x70] sm:$0xff] %v694
          %711 = vst [vmem:[%s380 + $0x78] sm:$0xff] %v695
        $region81: #{gcn_forward.5} parent=68 // pred_fallthru
          _
        %p712 = scmp.eq.s32.totalorder %s34, 3
        // Predicated region
        $region82: #{gcn_forward.5} parent=68 // pred_check
          %p713 = pneg %p712
        $region83: #{gcn_forward.5} parent=68 // pred_check_branch
          %715 = sbr.rel (%p713) target = $region85
        $region84: #{gcn_forward.5} parent=68 // pred_region
          %v716 = vld [vmem:[%s380] sm:$0xff]
          %v717 = vld [vmem:[%s380 + $0x8] sm:$0xff]
          %v718 = vld [vmem:[%s380 + $0x10] sm:$0xff]
          %v719 = vld [vmem:[%s380 + $0x18] sm:$0xff]
          %v720 = vld [vmem:[%s380 + $0x20] sm:$0xff]
          %v721 = vld [vmem:[%s380 + $0x28] sm:$0xff]
          %v722 = vld [vmem:[%s380 + $0x30] sm:$0xff]
          %v723 = vld [vmem:[%s380 + $0x38] sm:$0xff]
          %v724 = vld [vmem:[%s380 + $0x40] sm:$0xff]
          %v725 = vld [vmem:[%s380 + $0x48] sm:$0xff]
          %v726 = vld [vmem:[%s380 + $0x50] sm:$0xff]
          %v727 = vld [vmem:[%s380 + $0x58] sm:$0xff]
          %v728 = vld [vmem:[%s380 + $0x60] sm:$0xff]
          %v729 = vld [vmem:[%s380 + $0x68] sm:$0xff]
          %v730 = vld [vmem:[%s380 + $0x70] sm:$0xff]
          %v731 = vld [vmem:[%s380 + $0x78] sm:$0xff]
          %v732 = vld [vmem:[%s4] sm:$0x1]
          %v734 = vlaneseq
          %v735 = vshrl.u32 %v734, 7
          %v736 = vsub.s32 0, %v735
          %v737 = vrot.slane %v732, %v736
          %v739 = vadd.f32 %v716, %v737
          %v740 = vadd.f32 %v717, %v737
          %v741 = vadd.f32 %v718, %v737
          %v742 = vadd.f32 %v719, %v737
          %v743 = vadd.f32 %v720, %v737
          %v744 = vadd.f32 %v721, %v737
          %v745 = vadd.f32 %v722, %v737
          %v746 = vadd.f32 %v723, %v737
          %v747 = vadd.f32 %v724, %v737
          %v748 = vadd.f32 %v725, %v737
          %v749 = vadd.f32 %v726, %v737
          %v750 = vadd.f32 %v727, %v737
          %v751 = vadd.f32 %v728, %v737
          %v752 = vadd.f32 %v729, %v737
          %v753 = vadd.f32 %v730, %v737
          %v754 = vadd.f32 %v731, %v737
          %755 = vst [vmem:[%s380] sm:$0xff] %v739
          %756 = vst [vmem:[%s380 + $0x8] sm:$0xff] %v740
          %757 = vst [vmem:[%s380 + $0x10] sm:$0xff] %v741
          %758 = vst [vmem:[%s380 + $0x18] sm:$0xff] %v742
          %759 = vst [vmem:[%s380 + $0x20] sm:$0xff] %v743
          %760 = vst [vmem:[%s380 + $0x28] sm:$0xff] %v744
          %761 = vst [vmem:[%s380 + $0x30] sm:$0xff] %v745
          %762 = vst [vmem:[%s380 + $0x38] sm:$0xff] %v746
          %763 = vst [vmem:[%s380 + $0x40] sm:$0xff] %v747
          %764 = vst [vmem:[%s380 + $0x48] sm:$0xff] %v748
          %765 = vst [vmem:[%s380 + $0x50] sm:$0xff] %v749
          %766 = vst [vmem:[%s380 + $0x58] sm:$0xff] %v750
          %767 = vst [vmem:[%s380 + $0x60] sm:$0xff] %v751
          %768 = vst [vmem:[%s380 + $0x68] sm:$0xff] %v752
          %769 = vst [vmem:[%s380 + $0x70] sm:$0xff] %v753
          %770 = vst [vmem:[%s380 + $0x78] sm:$0xff] %v754
        $region85: #{gcn_forward.5} parent=68 // pred_fallthru
          _
        %s771 = sand.u32 %s156, 1
        %s772 = scalar_lea.sflag [#allocation7], %s771
        %s773 = sand.u32 %s156, 1
        %s774 = smul.addr %s773, 128
        %s775 = scalar_lea.vmem [#allocation6], %s774
        // Predicated region
        $region86: #{gcn_forward.5} parent=68 // pred_check
          %p776 = pneg %p166
        $region87: #{gcn_forward.5} parent=68 // pred_check_branch
          %778 = sbr.rel (%p776) target = $region89
        $region88: #{gcn_forward.5} parent=68 // pred_region
          %s779 = smul.u32 16, %s33
          %s781 = ssub.s32 2048, 2048
          %782 = vsyncadd %s772, %s781
          %s783 = smul.addr %s779, 128
          %s784 = scalar_lea.hbm %s5, %s783
          %s785 = sshll.u32 %s775, 4
          %s786 = int_to_ptr.vmem [resolvable:$true] %s785
          %791 = dma.vmem_to_hbm [thread:$0]  %s786, 2048, %s784, %s772, 128, 128, 8
        $region89: #{gcn_forward.5} parent=68 // pred_fallthru
          _
      $region69: #{gcn_forward.5} parent=5 // pred_fallthru
        _
      %p792 = scmp.le.s32.totalorder 2, %s24
      // Predicated region
      $region90: #{gcn_forward.5} parent=5 // pred_check
        %p793 = pneg %p792
      $region91: #{gcn_forward.5} parent=5 // pred_check_branch
        %795 = sbr.rel (%p793) target = $region93
      $region92: #{gcn_forward.5} parent=5 // pred_region
        %s796 = ssub.s32 %s24, 2
        // Predicated region
        $region94: #{gcn_forward.5} parent=92 // pred_check
          %p797 = pneg %p172
        $region95: #{gcn_forward.5} parent=92 // pred_check_branch
          %799 = sbr.rel (%p797) target = $region97
        $region96: #{gcn_forward.5} parent=92 // pred_region
          %s800 = sand.u32 %s157, 1
          %s801 = scalar_lea.sflag [#allocation7], %s800
          %s802 = sand.u32 %s157, 1
          %s803 = smul.addr %s802, 128
          %s804 = scalar_lea.vmem [#allocation6], %s803
          %805 = dma.done %s801, 2048
        $region97: #{gcn_forward.5} parent=92 // pred_fallthru
          _
      $region93: #{gcn_forward.5} parent=5 // pred_fallthru
        _
    $region6: #{gcn_forward.5} parent=1 // loop_footer
      %s28 = sadd.s32 1, %s24
    $region7: #{gcn_forward.5} parent=1 // loop_footer_branch
      %23 = sbr.rel target = $region3
    $region8: #{gcn_forward.5} parent=1 // loop_exit
      _
    %806 = vsyncpa [#allocation7], 1
    %s807 = scalar_lea.sflag [#allocation7], 1
    %808 = vsyncpa %s807, 1

</llo_original>
